<compile_context>
chip_gen: v6e
topology: v6e:2x2x1
jax: 0.10.0
libtpu: 0.0.40
codegen_flags: <defaults>
</compile_context>

<pallas_src>
import jax
import jax.numpy as jnp
from jax import lax
from jax.experimental import pallas as pl
from jax.experimental.pallas import tpu as pltpu


def _lstm_kernel(x2d_ref,            # (T*Bp, F)   bf16, time-major, batch-padded
                 wih0p_ref,           # (F, 8H)     bf16, [Wih0 | 0] (prescaled)
                 bpad_ref,            # (1, 8H)     f32,  [b0 | b1] (prescaled)
                 wf_ref,              # (2H, 8H)    bf16, [[Whh0|Wih1],[0|Whh1]]
                 wfc_ref, bfc_ref,    # (H, O) f32, (1, O) f32
                 out_ref,             # (Bp, O)     f32
                 add_buf):            # scratch VMEM (T*Bp, 8H) f32
    TB = x2d_ref.shape[0]
    Bp = out_ref.shape[0]
    T = TB // Bp
    H8 = wf_ref.shape[1]
    H4 = H8 // 2
    H = H4 // 4

    # ---- hoisted input projection for all timesteps, one MXU pass ----------
    # cols 0:4H  = x_t @ Wih0 + b0   (prescaled layer-0 input part of gates)
    # cols 4H:8H = b1                 (prescaled layer-1 bias, same every row)
    add_buf[...] = (jnp.dot(x2d_ref[...], wih0p_ref[...],
                            preferred_element_type=jnp.float32)
                    + bpad_ref[...])

    def cell(t4, c_prev):
        # t4 = tanh(prescaled gates).  sigmoid(z) = 0.5*tanh(z/2) + 0.5; the
        # z/2 is folded into the weights, so i/f/o only need the post-affine.
        i = t4[:, 0:H] * 0.5 + 0.5
        f = t4[:, H:2 * H] * 0.5 + 0.5
        g = t4[:, 2 * H:3 * H]
        o = t4[:, 3 * H:4 * H] * 0.5 + 0.5
        c = f * c_prev + i * g
        h = o * jnp.tanh(c)
        return h, c

    zeros_h = jnp.zeros((Bp, H), jnp.float32)

    # ---- prologue: layer-0 step 0 (zero recurrent input -> no matmul) ------
    t00 = jnp.tanh(add_buf[0:Bp, 0:H4])
    h0, c0 = cell(t00, zeros_h)
    h1, c1 = zeros_h, zeros_h           # layer-1 state lags one step behind

    # ---- wavefront loop: ONE fused (Bp,2H)@(2H,8H) bf16 MXU push per step --
    # lanes 0:4H  -> layer-0 recurrent gates for step w+1
    # lanes 4H:8H -> layer-1 gates for step w
    def wave(w, carry):
        h0, c0, h1, c1 = carry
        # (Bp, 2H) concat stays within one vreg lane-width; off MXU/EUP slots.
        lhs = jnp.concatenate([h0, h1], axis=1).astype(jnp.bfloat16)
        fused = jnp.dot(lhs, wf_ref[...], preferred_element_type=jnp.float32)
        row = pl.multiple_of((w + 1) * Bp, Bp)
        gates = fused + add_buf[pl.ds(row, Bp), :]
        t_all = jnp.tanh(gates)                  # single EUP pass, both layers
        h0n, c0n = cell(t_all[:, 0:H4], c0)      # layer 0, step w+1
        h1n, c1n = cell(t_all[:, H4:], c1)       # layer 1, step w
        return h0n, c0n, h1n, c1n

    h0, c0, h1, c1 = lax.fori_loop(0, T - 1, wave, (h0, c0, h1, c1),
                                   unroll=True)

    # ---- epilogue: layer-1 at the last timestep -----------------------------
    lhs = jnp.concatenate([h0, h1], axis=1).astype(jnp.bfloat16)
    g1 = (jnp.dot(lhs, wf_ref[:, H4:], preferred_element_type=jnp.float32)
          + bpad_ref[:, H4:])
    h1, c1 = cell(jnp.tanh(g1), c1)

    # ---- fc + exact softmax on the last layer-1 hidden ----------------------
    logits = (jnp.dot(h1, wfc_ref[...], preferred_element_type=jnp.float32)
              + bfc_ref[...])
    m = jnp.max(logits, axis=1, keepdims=True)
    e = jnp.exp(logits - m)
    out_ref[...] = e / jnp.sum(e, axis=1, keepdims=True)


def keyword_spotting_lstm(x, params):
    """x: (B, T, F) float32 (PyTorch batch_first). Returns (B, n_output) probs."""
    B, T, F = x.shape
    H = params["whh0"].shape[0]
    O = params["wfc"].shape[1]
    H4, H8 = 4 * H, 8 * H

    # Fold the sigmoid-as-tanh prescale (x0.5 on i/f/o gate columns, 1.0 on g)
    # into the weights/biases once, outside the kernel.
    gate_scale = jnp.concatenate([
        jnp.full((H,), 0.5, jnp.float32), jnp.full((H,), 0.5, jnp.float32),
        jnp.ones((H,), jnp.float32), jnp.full((H,), 0.5, jnp.float32)])
    wih0 = params["wih0"] * gate_scale
    whh0 = params["whh0"] * gate_scale
    b0 = params["b0"] * gate_scale
    wih1 = params["wih1"] * gate_scale
    whh1 = params["whh1"] * gate_scale
    b1 = params["b1"] * gate_scale

    # Layer-0 input projection padded to 8H lanes (right half zero) so the
    # hoisted projection also populates layer-1's bias lanes via bpad.
    wih0p = (jnp.zeros((F, H8), jnp.float32).at[:, :H4].set(wih0)
             .astype(jnp.bfloat16))
    bpad = jnp.concatenate([b0, b1], axis=1)                     # (1, 8H) f32

    # Fused recurrent weights:  [h0 | h1] @ wf -> [l0 recurrent | l1 gates]
    wf = jnp.zeros((2 * H, H8), jnp.float32)
    wf = wf.at[0:H, 0:H4].set(whh0)
    wf = wf.at[0:H, H4:H8].set(wih1)
    wf = wf.at[H:2 * H, H4:H8].set(whh1)
    wf = wf.astype(jnp.bfloat16)

    # Time-major, sublane-pad batch to a multiple of 8, flatten, bf16 for MXU.
    Bp = ((B + 7) // 8) * 8
    x_tm = jnp.transpose(x, (1, 0, 2))                           # (T, B, F)
    if Bp != B:
        x_tm = jnp.pad(x_tm, ((0, 0), (0, Bp - B), (0, 0)))
    x2d = x_tm.reshape(T * Bp, F).astype(jnp.bfloat16)           # (T*Bp, F)

    vmem = pl.BlockSpec(memory_space=pltpu.MemorySpace.VMEM)
    out = pl.pallas_call(
        _lstm_kernel,
        out_shape=jax.ShapeDtypeStruct((Bp, O), jnp.float32),
        in_specs=[vmem] * 6,
        out_specs=vmem,
        scratch_shapes=[pltpu.VMEM((T * Bp, H8), jnp.float32)],
    )(x2d, wih0p, bpad, wf, params["wfc"], params["bfc"])
    return out[:B]


def init_params(key, n_mfcc, n_hidden, n_output):
    """Deterministic init matching PyTorch LSTM/Linear parameter shapes.

    PyTorch stores weight_ih_l* as (4H, in), weight_hh_l* as (4H, H); we keep
    them transposed for right-multiplication and fold b_ih + b_hh into one
    bias per layer. Gate order i, f, g, o (PyTorch order).
    """
    ks = jax.random.split(key, 10)
    s = 1.0 / jnp.sqrt(n_hidden)

    def u(k, shape):
        return jax.random.uniform(k, shape, jnp.float32, -s, s)

    return {
        "wih0": u(ks[0], (n_mfcc, 4 * n_hidden)),
        "whh0": u(ks[1], (n_hidden, 4 * n_hidden)),
        "b0": u(ks[2], (1, 4 * n_hidden)) + u(ks[3], (1, 4 * n_hidden)),
        "wih1": u(ks[4], (n_hidden, 4 * n_hidden)),
        "whh1": u(ks[5], (n_hidden, 4 * n_hidden)),
        "b1": u(ks[6], (1, 4 * n_hidden)) + u(ks[7], (1, 4 * n_hidden)),
        "wfc": u(ks[8], (n_hidden, n_output)),
        "bfc": u(ks[9], (1, n_output)),
    }


def _reference_lstm(x, params):
    """Pure-JAX f32 reference matching the PyTorch forward pass."""
    B, T, _ = x.shape
    H = params["whh0"].shape[0]

    def sigmoid(z):
        return 1.0 / (1.0 + jnp.exp(-z))

    h0 = c0 = h1 = c1 = jnp.zeros((B, H), jnp.float32)
    for t in range(T):
        z0 = x[:, t, :] @ params["wih0"] + params["b0"] + h0 @ params["whh0"]
        i, f, g, o = jnp.split(z0, 4, axis=1)
        c0 = sigmoid(f) * c0 + sigmoid(i) * jnp.tanh(g)
        h0 = sigmoid(o) * jnp.tanh(c0)
        z1 = h0 @ params["wih1"] + params["b1"] + h1 @ params["whh1"]
        i, f, g, o = jnp.split(z1, 4, axis=1)
        c1 = sigmoid(f) * c1 + sigmoid(i) * jnp.tanh(g)
        h1 = sigmoid(o) * jnp.tanh(c1)
    logits = h1 @ params["wfc"] + params["bfc"]
    return jax.nn.softmax(logits, axis=1)


if __name__ == "__main__":
    B, T, F, H, O = 2, 8, 13, 32, 4  # batch, seq, n_mfcc, n_hidden, n_output
    key = jax.random.PRNGKey(0)
    k_x, k_p = jax.random.split(key)
    x = jax.random.normal(k_x, (B, T, F), jnp.float32)
    params = init_params(k_p, F, H, O)

    probs = keyword_spotting_lstm(x, params)
    probs = jax.block_until_ready(probs)

    assert probs.shape == (B, O)
    assert bool(jnp.all(jnp.isfinite(probs)))
    assert bool(jnp.allclose(jnp.sum(probs, axis=1), 1.0, atol=1e-4))
    # bf16 MXU operands, f32 accumulation/activations -> loose tolerance.
    ref = _reference_lstm(x, params)
    assert bool(jnp.allclose(probs, ref, atol=3e-2))
    print("KERNEL_OK")
</pallas_src>

<mosaic_0001>
module attributes {stable_mosaic.version = 11 : i64} {
  func.func @_lstm_kernel(%arg0: memref<64x13xbf16, #tpu.memory_space<vmem>>, %arg1: memref<13x256xbf16, #tpu.memory_space<vmem>>, %arg2: memref<1x256xf32, #tpu.memory_space<vmem>>, %arg3: memref<64x256xbf16, #tpu.memory_space<vmem>>, %arg4: memref<32x4xf32, #tpu.memory_space<vmem>>, %arg5: memref<1x4xf32, #tpu.memory_space<vmem>>, %arg6: memref<8x4xf32, #tpu.memory_space<vmem>>, %arg7: memref<64x256xf32, #tpu.memory_space<vmem>>) attributes {dimension_semantics = [], scalar_prefetch = 0 : i64, scratch_operands = 1 : i64, tpu.core_type = #tpu.core_type<tc>} {
    %c0 = arith.constant 0 : index
    %c0_0 = arith.constant 0 : index
    %0 = vector.load %arg0[%c0, %c0_0] : memref<64x13xbf16, #tpu.memory_space<vmem>>, vector<64x13xbf16>
    %c0_1 = arith.constant 0 : index
    %c0_2 = arith.constant 0 : index
    %1 = vector.load %arg1[%c0_1, %c0_2] : memref<13x256xbf16, #tpu.memory_space<vmem>>, vector<13x256xbf16>
    %cst = arith.constant dense<0.000000e+00> : vector<64x256xf32>
    %2 = tpu.matmul %0, %1, %cst {dimension_numbers = #tpu.dot_dimension_numbers<[1], [0], [0], [1], [0, 0, 1, 1], [], []>} : vector<64x13xbf16>, vector<13x256xbf16>, vector<64x256xf32> -> vector<64x256xf32>
    %c0_3 = arith.constant 0 : index
    %c0_4 = arith.constant 0 : index
    %3 = vector.load %arg2[%c0_3, %c0_4] : memref<1x256xf32, #tpu.memory_space<vmem>>, vector<1x256xf32>
    %4 = vector.broadcast %3 : vector<1x256xf32> to vector<64x256xf32>
    %5 = arith.addf %2, %4 : vector<64x256xf32>
    %c0_5 = arith.constant 0 : index
    %c0_6 = arith.constant 0 : index
    %6 = vector.load %arg7[%c0_5, %c0_6] : memref<64x256xf32, #tpu.memory_space<vmem>>, vector<64x256xf32>
    tpu.vector_store %arg7[%c0_5, %c0_6], %5 {strides = array<i32>} : memref<64x256xf32, #tpu.memory_space<vmem>>, vector<64x256xf32>,
    %cst_7 = arith.constant 0.000000e+00 : f32
    %7 = vector.broadcast %cst_7 : f32 to vector<8x32xf32>
    %c0_8 = arith.constant 0 : index
    %c0_9 = arith.constant 0 : index
    %8 = vector.load %arg7[%c0_8, %c0_9] : memref<64x256xf32, #tpu.memory_space<vmem>>, vector<8x128xf32>
    %9 = math.tanh %8 : vector<8x128xf32>
    %10 = vector.extract_strided_slice %9 {offsets = [0, 0], sizes = [8, 32], strides = [1, 1]} : vector<8x128xf32> to vector<8x32xf32>
    %cst_10 = arith.constant 5.000000e-01 : f32
    %11 = vector.broadcast %cst_10 : f32 to vector<8x32xf32>
    %12 = arith.mulf %10, %11 : vector<8x32xf32>
    %cst_11 = arith.constant 5.000000e-01 : f32
    %13 = vector.broadcast %cst_11 : f32 to vector<8x32xf32>
    %14 = arith.addf %12, %13 : vector<8x32xf32>
    %15 = vector.extract_strided_slice %9 {offsets = [0, 32], sizes = [8, 32], strides = [1, 1]} : vector<8x128xf32> to vector<8x32xf32>
    %cst_12 = arith.constant 5.000000e-01 : f32
    %16 = vector.broadcast %cst_12 : f32 to vector<8x32xf32>
    %17 = arith.mulf %15, %16 : vector<8x32xf32>
    %cst_13 = arith.constant 5.000000e-01 : f32
    %18 = vector.broadcast %cst_13 : f32 to vector<8x32xf32>
    %19 = arith.addf %17, %18 : vector<8x32xf32>
    %20 = vector.extract_strided_slice %9 {offsets = [0, 64], sizes = [8, 32], strides = [1, 1]} : vector<8x128xf32> to vector<8x32xf32>
    %21 = vector.extract_strided_slice %9 {offsets = [0, 96], sizes = [8, 32], strides = [1, 1]} : vector<8x128xf32> to vector<8x32xf32>
    %cst_14 = arith.constant 5.000000e-01 : f32
    %22 = vector.broadcast %cst_14 : f32 to vector<8x32xf32>
    %23 = arith.mulf %21, %22 : vector<8x32xf32>
    %cst_15 = arith.constant 5.000000e-01 : f32
    %24 = vector.broadcast %cst_15 : f32 to vector<8x32xf32>
    %25 = arith.addf %23, %24 : vector<8x32xf32>
    %26 = arith.mulf %19, %7 : vector<8x32xf32>
    %27 = arith.mulf %14, %20 : vector<8x32xf32>
    %28 = arith.addf %26, %27 : vector<8x32xf32>
    %29 = math.tanh %28 : vector<8x32xf32>
    %30 = arith.mulf %25, %29 : vector<8x32xf32>
    %c0_i32 = arith.constant 0 : i32
    %31 = tpu.concatenate %30, %7 in 1 : vector<8x32xf32>, vector<8x32xf32> -> vector<8x64xf32>
    %32 = arith.truncf %31 : vector<8x64xf32> to vector<8x64xbf16>
    %c0_16 = arith.constant 0 : index
    %c0_17 = arith.constant 0 : index
    %33 = vector.load %arg3[%c0_16, %c0_17] : memref<64x256xbf16, #tpu.memory_space<vmem>>, vector<64x256xbf16>
    %cst_18 = arith.constant dense<0.000000e+00> : vector<8x256xf32>
    %34 = tpu.matmul %32, %33, %cst_18 {dimension_numbers = #tpu.dot_dimension_numbers<[1], [0], [0], [1], [0, 0, 1, 1], [], []>} : vector<8x64xbf16>, vector<64x256xbf16>, vector<8x256xf32> -> vector<8x256xf32>
    %c1_i32 = arith.constant 1 : i32
    %35 = arith.addi %c0_i32, %c1_i32 : i32
    %c8_i32 = arith.constant 8 : i32
    %36 = arith.muli %35, %c8_i32 : i32
    %37 = tpu.assume_multiple %36, 8 : i32
    %38 = arith.index_cast %37 : i32 to index
    %c0_19 = arith.constant 0 : index
    %39 = vector.load %arg7[%38, %c0_19] : memref<64x256xf32, #tpu.memory_space<vmem>>, vector<8x256xf32>
    %40 = arith.addf %34, %39 : vector<8x256xf32>
    %41 = math.tanh %40 : vector<8x256xf32>
    %42 = vector.extract_strided_slice %41 {offsets = [0, 0], sizes = [8, 128], strides = [1, 1]} : vector<8x256xf32> to vector<8x128xf32>
    %43 = vector.extract_strided_slice %42 {offsets = [0, 0], sizes = [8, 32], strides = [1, 1]} : vector<8x128xf32> to vector<8x32xf32>
    %cst_20 = arith.constant 5.000000e-01 : f32
    %44 = vector.broadcast %cst_20 : f32 to vector<8x32xf32>
    %45 = arith.mulf %43, %44 : vector<8x32xf32>
    %cst_21 = arith.constant 5.000000e-01 : f32
    %46 = vector.broadcast %cst_21 : f32 to vector<8x32xf32>
    %47 = arith.addf %45, %46 : vector<8x32xf32>
    %48 = vector.extract_strided_slice %42 {offsets = [0, 32], sizes = [8, 32], strides = [1, 1]} : vector<8x128xf32> to vector<8x32xf32>
    %cst_22 = arith.constant 5.000000e-01 : f32
    %49 = vector.broadcast %cst_22 : f32 to vector<8x32xf32>
    %50 = arith.mulf %48, %49 : vector<8x32xf32>
    %cst_23 = arith.constant 5.000000e-01 : f32
    %51 = vector.broadcast %cst_23 : f32 to vector<8x32xf32>
    %52 = arith.addf %50, %51 : vector<8x32xf32>
    %53 = vector.extract_strided_slice %42 {offsets = [0, 64], sizes = [8, 32], strides = [1, 1]} : vector<8x128xf32> to vector<8x32xf32>
    %54 = vector.extract_strided_slice %42 {offsets = [0, 96], sizes = [8, 32], strides = [1, 1]} : vector<8x128xf32> to vector<8x32xf32>
    %cst_24 = arith.constant 5.000000e-01 : f32
    %55 = vector.broadcast %cst_24 : f32 to vector<8x32xf32>
    %56 = arith.mulf %54, %55 : vector<8x32xf32>
    %cst_25 = arith.constant 5.000000e-01 : f32
    %57 = vector.broadcast %cst_25 : f32 to vector<8x32xf32>
    %58 = arith.addf %56, %57 : vector<8x32xf32>
    %59 = arith.mulf %52, %28 : vector<8x32xf32>
    %60 = arith.mulf %47, %53 : vector<8x32xf32>
    %61 = arith.addf %59, %60 : vector<8x32xf32>
    %62 = math.tanh %61 : vector<8x32xf32>
    %63 = arith.mulf %58, %62 : vector<8x32xf32>
    %64 = vector.extract_strided_slice %41 {offsets = [0, 128], sizes = [8, 128], strides = [1, 1]} : vector<8x256xf32> to vector<8x128xf32>
    %65 = vector.extract_strided_slice %64 {offsets = [0, 0], sizes = [8, 32], strides = [1, 1]} : vector<8x128xf32> to vector<8x32xf32>
    %cst_26 = arith.constant 5.000000e-01 : f32
    %66 = vector.broadcast %cst_26 : f32 to vector<8x32xf32>
    %67 = arith.mulf %65, %66 : vector<8x32xf32>
    %cst_27 = arith.constant 5.000000e-01 : f32
    %68 = vector.broadcast %cst_27 : f32 to vector<8x32xf32>
    %69 = arith.addf %67, %68 : vector<8x32xf32>
    %70 = vector.extract_strided_slice %64 {offsets = [0, 32], sizes = [8, 32], strides = [1, 1]} : vector<8x128xf32> to vector<8x32xf32>
    %cst_28 = arith.constant 5.000000e-01 : f32
    %71 = vector.broadcast %cst_28 : f32 to vector<8x32xf32>
    %72 = arith.mulf %70, %71 : vector<8x32xf32>
    %cst_29 = arith.constant 5.000000e-01 : f32
    %73 = vector.broadcast %cst_29 : f32 to vector<8x32xf32>
    %74 = arith.addf %72, %73 : vector<8x32xf32>
    %75 = vector.extract_strided_slice %64 {offsets = [0, 64], sizes = [8, 32], strides = [1, 1]} : vector<8x128xf32> to vector<8x32xf32>
    %76 = vector.extract_strided_slice %64 {offsets = [0, 96], sizes = [8, 32], strides = [1, 1]} : vector<8x128xf32> to vector<8x32xf32>
    %cst_30 = arith.constant 5.000000e-01 : f32
    %77 = vector.broadcast %cst_30 : f32 to vector<8x32xf32>
    %78 = arith.mulf %76, %77 : vector<8x32xf32>
    %cst_31 = arith.constant 5.000000e-01 : f32
    %79 = vector.broadcast %cst_31 : f32 to vector<8x32xf32>
    %80 = arith.addf %78, %79 : vector<8x32xf32>
    %81 = arith.mulf %74, %7 : vector<8x32xf32>
    %82 = arith.mulf %69, %75 : vector<8x32xf32>
    %83 = arith.addf %81, %82 : vector<8x32xf32>
    %84 = math.tanh %83 : vector<8x32xf32>
    %85 = arith.mulf %80, %84 : vector<8x32xf32>
    %c1_i32_32 = arith.constant 1 : i32
    %86 = tpu.concatenate %63, %85 in 1 : vector<8x32xf32>, vector<8x32xf32> -> vector<8x64xf32>
    %87 = arith.truncf %86 : vector<8x64xf32> to vector<8x64xbf16>
    %c0_33 = arith.constant 0 : index
    %c0_34 = arith.constant 0 : index
    %88 = vector.load %arg3[%c0_33, %c0_34] : memref<64x256xbf16, #tpu.memory_space<vmem>>, vector<64x256xbf16>
    %cst_35 = arith.constant dense<0.000000e+00> : vector<8x256xf32>
    %89 = tpu.matmul %87, %88, %cst_35 {dimension_numbers = #tpu.dot_dimension_numbers<[1], [0], [0], [1], [0, 0, 1, 1], [], []>} : vector<8x64xbf16>, vector<64x256xbf16>, vector<8x256xf32> -> vector<8x256xf32>
    %c1_i32_36 = arith.constant 1 : i32
    %90 = arith.addi %c1_i32_32, %c1_i32_36 : i32
    %c8_i32_37 = arith.constant 8 : i32
    %91 = arith.muli %90, %c8_i32_37 : i32
    %92 = tpu.assume_multiple %91, 8 : i32
    %93 = arith.index_cast %92 : i32 to index
    %c0_38 = arith.constant 0 : index
    %94 = vector.load %arg7[%93, %c0_38] : memref<64x256xf32, #tpu.memory_space<vmem>>, vector<8x256xf32>
    %95 = arith.addf %89, %94 : vector<8x256xf32>
    %96 = math.tanh %95 : vector<8x256xf32>
    %97 = vector.extract_strided_slice %96 {offsets = [0, 0], sizes = [8, 128], strides = [1, 1]} : vector<8x256xf32> to vector<8x128xf32>
    %98 = vector.extract_strided_slice %97 {offsets = [0, 0], sizes = [8, 32], strides = [1, 1]} : vector<8x128xf32> to vector<8x32xf32>
    %cst_39 = arith.constant 5.000000e-01 : f32
    %99 = vector.broadcast %cst_39 : f32 to vector<8x32xf32>
    %100 = arith.mulf %98, %99 : vector<8x32xf32>
    %cst_40 = arith.constant 5.000000e-01 : f32
    %101 = vector.broadcast %cst_40 : f32 to vector<8x32xf32>
    %102 = arith.addf %100, %101 : vector<8x32xf32>
    %103 = vector.extract_strided_slice %97 {offsets = [0, 32], sizes = [8, 32], strides = [1, 1]} : vector<8x128xf32> to vector<8x32xf32>
    %cst_41 = arith.constant 5.000000e-01 : f32
    %104 = vector.broadcast %cst_41 : f32 to vector<8x32xf32>
    %105 = arith.mulf %103, %104 : vector<8x32xf32>
    %cst_42 = arith.constant 5.000000e-01 : f32
    %106 = vector.broadcast %cst_42 : f32 to vector<8x32xf32>
    %107 = arith.addf %105, %106 : vector<8x32xf32>
    %108 = vector.extract_strided_slice %97 {offsets = [0, 64], sizes = [8, 32], strides = [1, 1]} : vector<8x128xf32> to vector<8x32xf32>
    %109 = vector.extract_strided_slice %97 {offsets = [0, 96], sizes = [8, 32], strides = [1, 1]} : vector<8x128xf32> to vector<8x32xf32>
    %cst_43 = arith.constant 5.000000e-01 : f32
    %110 = vector.broadcast %cst_43 : f32 to vector<8x32xf32>
    %111 = arith.mulf %109, %110 : vector<8x32xf32>
    %cst_44 = arith.constant 5.000000e-01 : f32
    %112 = vector.broadcast %cst_44 : f32 to vector<8x32xf32>
    %113 = arith.addf %111, %112 : vector<8x32xf32>
    %114 = arith.mulf %107, %61 : vector<8x32xf32>
    %115 = arith.mulf %102, %108 : vector<8x32xf32>
    %116 = arith.addf %114, %115 : vector<8x32xf32>
    %117 = math.tanh %116 : vector<8x32xf32>
    %118 = arith.mulf %113, %117 : vector<8x32xf32>
    %119 = vector.extract_strided_slice %96 {offsets = [0, 128], sizes = [8, 128], strides = [1, 1]} : vector<8x256xf32> to vector<8x128xf32>
    %120 = vector.extract_strided_slice %119 {offsets = [0, 0], sizes = [8, 32], strides = [1, 1]} : vector<8x128xf32> to vector<8x32xf32>
    %cst_45 = arith.constant 5.000000e-01 : f32
    %121 = vector.broadcast %cst_45 : f32 to vector<8x32xf32>
    %122 = arith.mulf %120, %121 : vector<8x32xf32>
    %cst_46 = arith.constant 5.000000e-01 : f32
    %123 = vector.broadcast %cst_46 : f32 to vector<8x32xf32>
    %124 = arith.addf %122, %123 : vector<8x32xf32>
    %125 = vector.extract_strided_slice %119 {offsets = [0, 32], sizes = [8, 32], strides = [1, 1]} : vector<8x128xf32> to vector<8x32xf32>
    %cst_47 = arith.constant 5.000000e-01 : f32
    %126 = vector.broadcast %cst_47 : f32 to vector<8x32xf32>
    %127 = arith.mulf %125, %126 : vector<8x32xf32>
    %cst_48 = arith.constant 5.000000e-01 : f32
    %128 = vector.broadcast %cst_48 : f32 to vector<8x32xf32>
    %129 = arith.addf %127, %128 : vector<8x32xf32>
    %130 = vector.extract_strided_slice %119 {offsets = [0, 64], sizes = [8, 32], strides = [1, 1]} : vector<8x128xf32> to vector<8x32xf32>
    %131 = vector.extract_strided_slice %119 {offsets = [0, 96], sizes = [8, 32], strides = [1, 1]} : vector<8x128xf32> to vector<8x32xf32>
    %cst_49 = arith.constant 5.000000e-01 : f32
    %132 = vector.broadcast %cst_49 : f32 to vector<8x32xf32>
    %133 = arith.mulf %131, %132 : vector<8x32xf32>
    %cst_50 = arith.constant 5.000000e-01 : f32
    %134 = vector.broadcast %cst_50 : f32 to vector<8x32xf32>
    %135 = arith.addf %133, %134 : vector<8x32xf32>
    %136 = arith.mulf %129, %83 : vector<8x32xf32>
    %137 = arith.mulf %124, %130 : vector<8x32xf32>
    %138 = arith.addf %136, %137 : vector<8x32xf32>
    %139 = math.tanh %138 : vector<8x32xf32>
    %140 = arith.mulf %135, %139 : vector<8x32xf32>
    %c2_i32 = arith.constant 2 : i32
    %141 = tpu.concatenate %118, %140 in 1 : vector<8x32xf32>, vector<8x32xf32> -> vector<8x64xf32>
    %142 = arith.truncf %141 : vector<8x64xf32> to vector<8x64xbf16>
    %c0_51 = arith.constant 0 : index
    %c0_52 = arith.constant 0 : index
    %143 = vector.load %arg3[%c0_51, %c0_52] : memref<64x256xbf16, #tpu.memory_space<vmem>>, vector<64x256xbf16>
    %cst_53 = arith.constant dense<0.000000e+00> : vector<8x256xf32>
    %144 = tpu.matmul %142, %143, %cst_53 {dimension_numbers = #tpu.dot_dimension_numbers<[1], [0], [0], [1], [0, 0, 1, 1], [], []>} : vector<8x64xbf16>, vector<64x256xbf16>, vector<8x256xf32> -> vector<8x256xf32>
    %c1_i32_54 = arith.constant 1 : i32
    %145 = arith.addi %c2_i32, %c1_i32_54 : i32
    %c8_i32_55 = arith.constant 8 : i32
    %146 = arith.muli %145, %c8_i32_55 : i32
    %147 = tpu.assume_multiple %146, 8 : i32
    %148 = arith.index_cast %147 : i32 to index
    %c0_56 = arith.constant 0 : index
    %149 = vector.load %arg7[%148, %c0_56] : memref<64x256xf32, #tpu.memory_space<vmem>>, vector<8x256xf32>
    %150 = arith.addf %144, %149 : vector<8x256xf32>
    %151 = math.tanh %150 : vector<8x256xf32>
    %152 = vector.extract_strided_slice %151 {offsets = [0, 0], sizes = [8, 128], strides = [1, 1]} : vector<8x256xf32> to vector<8x128xf32>
    %153 = vector.extract_strided_slice %152 {offsets = [0, 0], sizes = [8, 32], strides = [1, 1]} : vector<8x128xf32> to vector<8x32xf32>
    %cst_57 = arith.constant 5.000000e-01 : f32
    %154 = vector.broadcast %cst_57 : f32 to vector<8x32xf32>
    %155 = arith.mulf %153, %154 : vector<8x32xf32>
    %cst_58 = arith.constant 5.000000e-01 : f32
    %156 = vector.broadcast %cst_58 : f32 to vector<8x32xf32>
    %157 = arith.addf %155, %156 : vector<8x32xf32>
    %158 = vector.extract_strided_slice %152 {offsets = [0, 32], sizes = [8, 32], strides = [1, 1]} : vector<8x128xf32> to vector<8x32xf32>
    %cst_59 = arith.constant 5.000000e-01 : f32
    %159 = vector.broadcast %cst_59 : f32 to vector<8x32xf32>
    %160 = arith.mulf %158, %159 : vector<8x32xf32>
    %cst_60 = arith.constant 5.000000e-01 : f32
    %161 = vector.broadcast %cst_60 : f32 to vector<8x32xf32>
    %162 = arith.addf %160, %161 : vector<8x32xf32>
    %163 = vector.extract_strided_slice %152 {offsets = [0, 64], sizes = [8, 32], strides = [1, 1]} : vector<8x128xf32> to vector<8x32xf32>
    %164 = vector.extract_strided_slice %152 {offsets = [0, 96], sizes = [8, 32], strides = [1, 1]} : vector<8x128xf32> to vector<8x32xf32>
    %cst_61 = arith.constant 5.000000e-01 : f32
    %165 = vector.broadcast %cst_61 : f32 to vector<8x32xf32>
    %166 = arith.mulf %164, %165 : vector<8x32xf32>
    %cst_62 = arith.constant 5.000000e-01 : f32
    %167 = vector.broadcast %cst_62 : f32 to vector<8x32xf32>
    %168 = arith.addf %166, %167 : vector<8x32xf32>
    %169 = arith.mulf %162, %116 : vector<8x32xf32>
    %170 = arith.mulf %157, %163 : vector<8x32xf32>
    %171 = arith.addf %169, %170 : vector<8x32xf32>
    %172 = math.tanh %171 : vector<8x32xf32>
    %173 = arith.mulf %168, %172 : vector<8x32xf32>
    %174 = vector.extract_strided_slice %151 {offsets = [0, 128], sizes = [8, 128], strides = [1, 1]} : vector<8x256xf32> to vector<8x128xf32>
    %175 = vector.extract_strided_slice %174 {offsets = [0, 0], sizes = [8, 32], strides = [1, 1]} : vector<8x128xf32> to vector<8x32xf32>
    %cst_63 = arith.constant 5.000000e-01 : f32
    %176 = vector.broadcast %cst_63 : f32 to vector<8x32xf32>
    %177 = arith.mulf %175, %176 : vector<8x32xf32>
    %cst_64 = arith.constant 5.000000e-01 : f32
    %178 = vector.broadcast %cst_64 : f32 to vector<8x32xf32>
    %179 = arith.addf %177, %178 : vector<8x32xf32>
    %180 = vector.extract_strided_slice %174 {offsets = [0, 32], sizes = [8, 32], strides = [1, 1]} : vector<8x128xf32> to vector<8x32xf32>
    %cst_65 = arith.constant 5.000000e-01 : f32
    %181 = vector.broadcast %cst_65 : f32 to vector<8x32xf32>
    %182 = arith.mulf %180, %181 : vector<8x32xf32>
    %cst_66 = arith.constant 5.000000e-01 : f32
    %183 = vector.broadcast %cst_66 : f32 to vector<8x32xf32>
    %184 = arith.addf %182, %183 : vector<8x32xf32>
    %185 = vector.extract_strided_slice %174 {offsets = [0, 64], sizes = [8, 32], strides = [1, 1]} : vector<8x128xf32> to vector<8x32xf32>
    %186 = vector.extract_strided_slice %174 {offsets = [0, 96], sizes = [8, 32], strides = [1, 1]} : vector<8x128xf32> to vector<8x32xf32>
    %cst_67 = arith.constant 5.000000e-01 : f32
    %187 = vector.broadcast %cst_67 : f32 to vector<8x32xf32>
    %188 = arith.mulf %186, %187 : vector<8x32xf32>
    %cst_68 = arith.constant 5.000000e-01 : f32
    %189 = vector.broadcast %cst_68 : f32 to vector<8x32xf32>
    %190 = arith.addf %188, %189 : vector<8x32xf32>
    %191 = arith.mulf %184, %138 : vector<8x32xf32>
    %192 = arith.mulf %179, %185 : vector<8x32xf32>
    %193 = arith.addf %191, %192 : vector<8x32xf32>
    %194 = math.tanh %193 : vector<8x32xf32>
    %195 = arith.mulf %190, %194 : vector<8x32xf32>
    %c3_i32 = arith.constant 3 : i32
    %196 = tpu.concatenate %173, %195 in 1 : vector<8x32xf32>, vector<8x32xf32> -> vector<8x64xf32>
    %197 = arith.truncf %196 : vector<8x64xf32> to vector<8x64xbf16>
    %c0_69 = arith.constant 0 : index
    %c0_70 = arith.constant 0 : index
    %198 = vector.load %arg3[%c0_69, %c0_70] : memref<64x256xbf16, #tpu.memory_space<vmem>>, vector<64x256xbf16>
    %cst_71 = arith.constant dense<0.000000e+00> : vector<8x256xf32>
    %199 = tpu.matmul %197, %198, %cst_71 {dimension_numbers = #tpu.dot_dimension_numbers<[1], [0], [0], [1], [0, 0, 1, 1], [], []>} : vector<8x64xbf16>, vector<64x256xbf16>, vector<8x256xf32> -> vector<8x256xf32>
    %c1_i32_72 = arith.constant 1 : i32
    %200 = arith.addi %c3_i32, %c1_i32_72 : i32
    %c8_i32_73 = arith.constant 8 : i32
    %201 = arith.muli %200, %c8_i32_73 : i32
    %202 = tpu.assume_multiple %201, 8 : i32
    %203 = arith.index_cast %202 : i32 to index
    %c0_74 = arith.constant 0 : index
    %204 = vector.load %arg7[%203, %c0_74] : memref<64x256xf32, #tpu.memory_space<vmem>>, vector<8x256xf32>
    %205 = arith.addf %199, %204 : vector<8x256xf32>
    %206 = math.tanh %205 : vector<8x256xf32>
    %207 = vector.extract_strided_slice %206 {offsets = [0, 0], sizes = [8, 128], strides = [1, 1]} : vector<8x256xf32> to vector<8x128xf32>
    %208 = vector.extract_strided_slice %207 {offsets = [0, 0], sizes = [8, 32], strides = [1, 1]} : vector<8x128xf32> to vector<8x32xf32>
    %cst_75 = arith.constant 5.000000e-01 : f32
    %209 = vector.broadcast %cst_75 : f32 to vector<8x32xf32>
    %210 = arith.mulf %208, %209 : vector<8x32xf32>
    %cst_76 = arith.constant 5.000000e-01 : f32
    %211 = vector.broadcast %cst_76 : f32 to vector<8x32xf32>
    %212 = arith.addf %210, %211 : vector<8x32xf32>
    %213 = vector.extract_strided_slice %207 {offsets = [0, 32], sizes = [8, 32], strides = [1, 1]} : vector<8x128xf32> to vector<8x32xf32>
    %cst_77 = arith.constant 5.000000e-01 : f32
    %214 = vector.broadcast %cst_77 : f32 to vector<8x32xf32>
    %215 = arith.mulf %213, %214 : vector<8x32xf32>
    %cst_78 = arith.constant 5.000000e-01 : f32
    %216 = vector.broadcast %cst_78 : f32 to vector<8x32xf32>
    %217 = arith.addf %215, %216 : vector<8x32xf32>
    %218 = vector.extract_strided_slice %207 {offsets = [0, 64], sizes = [8, 32], strides = [1, 1]} : vector<8x128xf32> to vector<8x32xf32>
    %219 = vector.extract_strided_slice %207 {offsets = [0, 96], sizes = [8, 32], strides = [1, 1]} : vector<8x128xf32> to vector<8x32xf32>
    %cst_79 = arith.constant 5.000000e-01 : f32
    %220 = vector.broadcast %cst_79 : f32 to vector<8x32xf32>
    %221 = arith.mulf %219, %220 : vector<8x32xf32>
    %cst_80 = arith.constant 5.000000e-01 : f32
    %222 = vector.broadcast %cst_80 : f32 to vector<8x32xf32>
    %223 = arith.addf %221, %222 : vector<8x32xf32>
    %224 = arith.mulf %217, %171 : vector<8x32xf32>
    %225 = arith.mulf %212, %218 : vector<8x32xf32>
    %226 = arith.addf %224, %225 : vector<8x32xf32>
    %227 = math.tanh %226 : vector<8x32xf32>
    %228 = arith.mulf %223, %227 : vector<8x32xf32>
    %229 = vector.extract_strided_slice %206 {offsets = [0, 128], sizes = [8, 128], strides = [1, 1]} : vector<8x256xf32> to vector<8x128xf32>
    %230 = vector.extract_strided_slice %229 {offsets = [0, 0], sizes = [8, 32], strides = [1, 1]} : vector<8x128xf32> to vector<8x32xf32>
    %cst_81 = arith.constant 5.000000e-01 : f32
    %231 = vector.broadcast %cst_81 : f32 to vector<8x32xf32>
    %232 = arith.mulf %230, %231 : vector<8x32xf32>
    %cst_82 = arith.constant 5.000000e-01 : f32
    %233 = vector.broadcast %cst_82 : f32 to vector<8x32xf32>
    %234 = arith.addf %232, %233 : vector<8x32xf32>
    %235 = vector.extract_strided_slice %229 {offsets = [0, 32], sizes = [8, 32], strides = [1, 1]} : vector<8x128xf32> to vector<8x32xf32>
    %cst_83 = arith.constant 5.000000e-01 : f32
    %236 = vector.broadcast %cst_83 : f32 to vector<8x32xf32>
    %237 = arith.mulf %235, %236 : vector<8x32xf32>
    %cst_84 = arith.constant 5.000000e-01 : f32
    %238 = vector.broadcast %cst_84 : f32 to vector<8x32xf32>
    %239 = arith.addf %237, %238 : vector<8x32xf32>
    %240 = vector.extract_strided_slice %229 {offsets = [0, 64], sizes = [8, 32], strides = [1, 1]} : vector<8x128xf32> to vector<8x32xf32>
    %241 = vector.extract_strided_slice %229 {offsets = [0, 96], sizes = [8, 32], strides = [1, 1]} : vector<8x128xf32> to vector<8x32xf32>
    %cst_85 = arith.constant 5.000000e-01 : f32
    %242 = vector.broadcast %cst_85 : f32 to vector<8x32xf32>
    %243 = arith.mulf %241, %242 : vector<8x32xf32>
    %cst_86 = arith.constant 5.000000e-01 : f32
    %244 = vector.broadcast %cst_86 : f32 to vector<8x32xf32>
    %245 = arith.addf %243, %244 : vector<8x32xf32>
    %246 = arith.mulf %239, %193 : vector<8x32xf32>
    %247 = arith.mulf %234, %240 : vector<8x32xf32>
    %248 = arith.addf %246, %247 : vector<8x32xf32>
    %249 = math.tanh %248 : vector<8x32xf32>
    %250 = arith.mulf %245, %249 : vector<8x32xf32>
    %c4_i32 = arith.constant 4 : i32
    %251 = tpu.concatenate %228, %250 in 1 : vector<8x32xf32>, vector<8x32xf32> -> vector<8x64xf32>
    %252 = arith.truncf %251 : vector<8x64xf32> to vector<8x64xbf16>
    %c0_87 = arith.constant 0 : index
    %c0_88 = arith.constant 0 : index
    %253 = vector.load %arg3[%c0_87, %c0_88] : memref<64x256xbf16, #tpu.memory_space<vmem>>, vector<64x256xbf16>
    %cst_89 = arith.constant dense<0.000000e+00> : vector<8x256xf32>
    %254 = tpu.matmul %252, %253, %cst_89 {dimension_numbers = #tpu.dot_dimension_numbers<[1], [0], [0], [1], [0, 0, 1, 1], [], []>} : vector<8x64xbf16>, vector<64x256xbf16>, vector<8x256xf32> -> vector<8x256xf32>
    %c1_i32_90 = arith.constant 1 : i32
    %255 = arith.addi %c4_i32, %c1_i32_90 : i32
    %c8_i32_91 = arith.constant 8 : i32
    %256 = arith.muli %255, %c8_i32_91 : i32
    %257 = tpu.assume_multiple %256, 8 : i32
    %258 = arith.index_cast %257 : i32 to index
    %c0_92 = arith.constant 0 : index
    %259 = vector.load %arg7[%258, %c0_92] : memref<64x256xf32, #tpu.memory_space<vmem>>, vector<8x256xf32>
    %260 = arith.addf %254, %259 : vector<8x256xf32>
    %261 = math.tanh %260 : vector<8x256xf32>
    %262 = vector.extract_strided_slice %261 {offsets = [0, 0], sizes = [8, 128], strides = [1, 1]} : vector<8x256xf32> to vector<8x128xf32>
    %263 = vector.extract_strided_slice %262 {offsets = [0, 0], sizes = [8, 32], strides = [1, 1]} : vector<8x128xf32> to vector<8x32xf32>
    %cst_93 = arith.constant 5.000000e-01 : f32
    %264 = vector.broadcast %cst_93 : f32 to vector<8x32xf32>
    %265 = arith.mulf %263, %264 : vector<8x32xf32>
    %cst_94 = arith.constant 5.000000e-01 : f32
    %266 = vector.broadcast %cst_94 : f32 to vector<8x32xf32>
    %267 = arith.addf %265, %266 : vector<8x32xf32>
    %268 = vector.extract_strided_slice %262 {offsets = [0, 32], sizes = [8, 32], strides = [1, 1]} : vector<8x128xf32> to vector<8x32xf32>
    %cst_95 = arith.constant 5.000000e-01 : f32
    %269 = vector.broadcast %cst_95 : f32 to vector<8x32xf32>
    %270 = arith.mulf %268, %269 : vector<8x32xf32>
    %cst_96 = arith.constant 5.000000e-01 : f32
    %271 = vector.broadcast %cst_96 : f32 to vector<8x32xf32>
    %272 = arith.addf %270, %271 : vector<8x32xf32>
    %273 = vector.extract_strided_slice %262 {offsets = [0, 64], sizes = [8, 32], strides = [1, 1]} : vector<8x128xf32> to vector<8x32xf32>
    %274 = vector.extract_strided_slice %262 {offsets = [0, 96], sizes = [8, 32], strides = [1, 1]} : vector<8x128xf32> to vector<8x32xf32>
    %cst_97 = arith.constant 5.000000e-01 : f32
    %275 = vector.broadcast %cst_97 : f32 to vector<8x32xf32>
    %276 = arith.mulf %274, %275 : vector<8x32xf32>
    %cst_98 = arith.constant 5.000000e-01 : f32
    %277 = vector.broadcast %cst_98 : f32 to vector<8x32xf32>
    %278 = arith.addf %276, %277 : vector<8x32xf32>
    %279 = arith.mulf %272, %226 : vector<8x32xf32>
    %280 = arith.mulf %267, %273 : vector<8x32xf32>
    %281 = arith.addf %279, %280 : vector<8x32xf32>
    %282 = math.tanh %281 : vector<8x32xf32>
    %283 = arith.mulf %278, %282 : vector<8x32xf32>
    %284 = vector.extract_strided_slice %261 {offsets = [0, 128], sizes = [8, 128], strides = [1, 1]} : vector<8x256xf32> to vector<8x128xf32>
    %285 = vector.extract_strided_slice %284 {offsets = [0, 0], sizes = [8, 32], strides = [1, 1]} : vector<8x128xf32> to vector<8x32xf32>
    %cst_99 = arith.constant 5.000000e-01 : f32
    %286 = vector.broadcast %cst_99 : f32 to vector<8x32xf32>
    %287 = arith.mulf %285, %286 : vector<8x32xf32>
    %cst_100 = arith.constant 5.000000e-01 : f32
    %288 = vector.broadcast %cst_100 : f32 to vector<8x32xf32>
    %289 = arith.addf %287, %288 : vector<8x32xf32>
    %290 = vector.extract_strided_slice %284 {offsets = [0, 32], sizes = [8, 32], strides = [1, 1]} : vector<8x128xf32> to vector<8x32xf32>
    %cst_101 = arith.constant 5.000000e-01 : f32
    %291 = vector.broadcast %cst_101 : f32 to vector<8x32xf32>
    %292 = arith.mulf %290, %291 : vector<8x32xf32>
    %cst_102 = arith.constant 5.000000e-01 : f32
    %293 = vector.broadcast %cst_102 : f32 to vector<8x32xf32>
    %294 = arith.addf %292, %293 : vector<8x32xf32>
    %295 = vector.extract_strided_slice %284 {offsets = [0, 64], sizes = [8, 32], strides = [1, 1]} : vector<8x128xf32> to vector<8x32xf32>
    %296 = vector.extract_strided_slice %284 {offsets = [0, 96], sizes = [8, 32], strides = [1, 1]} : vector<8x128xf32> to vector<8x32xf32>
    %cst_103 = arith.constant 5.000000e-01 : f32
    %297 = vector.broadcast %cst_103 : f32 to vector<8x32xf32>
    %298 = arith.mulf %296, %297 : vector<8x32xf32>
    %cst_104 = arith.constant 5.000000e-01 : f32
    %299 = vector.broadcast %cst_104 : f32 to vector<8x32xf32>
    %300 = arith.addf %298, %299 : vector<8x32xf32>
    %301 = arith.mulf %294, %248 : vector<8x32xf32>
    %302 = arith.mulf %289, %295 : vector<8x32xf32>
    %303 = arith.addf %301, %302 : vector<8x32xf32>
    %304 = math.tanh %303 : vector<8x32xf32>
    %305 = arith.mulf %300, %304 : vector<8x32xf32>
    %c5_i32 = arith.constant 5 : i32
    %306 = tpu.concatenate %283, %305 in 1 : vector<8x32xf32>, vector<8x32xf32> -> vector<8x64xf32>
    %307 = arith.truncf %306 : vector<8x64xf32> to vector<8x64xbf16>
    %c0_105 = arith.constant 0 : index
    %c0_106 = arith.constant 0 : index
    %308 = vector.load %arg3[%c0_105, %c0_106] : memref<64x256xbf16, #tpu.memory_space<vmem>>, vector<64x256xbf16>
    %cst_107 = arith.constant dense<0.000000e+00> : vector<8x256xf32>
    %309 = tpu.matmul %307, %308, %cst_107 {dimension_numbers = #tpu.dot_dimension_numbers<[1], [0], [0], [1], [0, 0, 1, 1], [], []>} : vector<8x64xbf16>, vector<64x256xbf16>, vector<8x256xf32> -> vector<8x256xf32>
    %c1_i32_108 = arith.constant 1 : i32
    %310 = arith.addi %c5_i32, %c1_i32_108 : i32
    %c8_i32_109 = arith.constant 8 : i32
    %311 = arith.muli %310, %c8_i32_109 : i32
    %312 = tpu.assume_multiple %311, 8 : i32
    %313 = arith.index_cast %312 : i32 to index
    %c0_110 = arith.constant 0 : index
    %314 = vector.load %arg7[%313, %c0_110] : memref<64x256xf32, #tpu.memory_space<vmem>>, vector<8x256xf32>
    %315 = arith.addf %309, %314 : vector<8x256xf32>
    %316 = math.tanh %315 : vector<8x256xf32>
    %317 = vector.extract_strided_slice %316 {offsets = [0, 0], sizes = [8, 128], strides = [1, 1]} : vector<8x256xf32> to vector<8x128xf32>
    %318 = vector.extract_strided_slice %317 {offsets = [0, 0], sizes = [8, 32], strides = [1, 1]} : vector<8x128xf32> to vector<8x32xf32>
    %cst_111 = arith.constant 5.000000e-01 : f32
    %319 = vector.broadcast %cst_111 : f32 to vector<8x32xf32>
    %320 = arith.mulf %318, %319 : vector<8x32xf32>
    %cst_112 = arith.constant 5.000000e-01 : f32
    %321 = vector.broadcast %cst_112 : f32 to vector<8x32xf32>
    %322 = arith.addf %320, %321 : vector<8x32xf32>
    %323 = vector.extract_strided_slice %317 {offsets = [0, 32], sizes = [8, 32], strides = [1, 1]} : vector<8x128xf32> to vector<8x32xf32>
    %cst_113 = arith.constant 5.000000e-01 : f32
    %324 = vector.broadcast %cst_113 : f32 to vector<8x32xf32>
    %325 = arith.mulf %323, %324 : vector<8x32xf32>
    %cst_114 = arith.constant 5.000000e-01 : f32
    %326 = vector.broadcast %cst_114 : f32 to vector<8x32xf32>
    %327 = arith.addf %325, %326 : vector<8x32xf32>
    %328 = vector.extract_strided_slice %317 {offsets = [0, 64], sizes = [8, 32], strides = [1, 1]} : vector<8x128xf32> to vector<8x32xf32>
    %329 = vector.extract_strided_slice %317 {offsets = [0, 96], sizes = [8, 32], strides = [1, 1]} : vector<8x128xf32> to vector<8x32xf32>
    %cst_115 = arith.constant 5.000000e-01 : f32
    %330 = vector.broadcast %cst_115 : f32 to vector<8x32xf32>
    %331 = arith.mulf %329, %330 : vector<8x32xf32>
    %cst_116 = arith.constant 5.000000e-01 : f32
    %332 = vector.broadcast %cst_116 : f32 to vector<8x32xf32>
    %333 = arith.addf %331, %332 : vector<8x32xf32>
    %334 = arith.mulf %327, %281 : vector<8x32xf32>
    %335 = arith.mulf %322, %328 : vector<8x32xf32>
    %336 = arith.addf %334, %335 : vector<8x32xf32>
    %337 = math.tanh %336 : vector<8x32xf32>
    %338 = arith.mulf %333, %337 : vector<8x32xf32>
    %339 = vector.extract_strided_slice %316 {offsets = [0, 128], sizes = [8, 128], strides = [1, 1]} : vector<8x256xf32> to vector<8x128xf32>
    %340 = vector.extract_strided_slice %339 {offsets = [0, 0], sizes = [8, 32], strides = [1, 1]} : vector<8x128xf32> to vector<8x32xf32>
    %cst_117 = arith.constant 5.000000e-01 : f32
    %341 = vector.broadcast %cst_117 : f32 to vector<8x32xf32>
    %342 = arith.mulf %340, %341 : vector<8x32xf32>
    %cst_118 = arith.constant 5.000000e-01 : f32
    %343 = vector.broadcast %cst_118 : f32 to vector<8x32xf32>
    %344 = arith.addf %342, %343 : vector<8x32xf32>
    %345 = vector.extract_strided_slice %339 {offsets = [0, 32], sizes = [8, 32], strides = [1, 1]} : vector<8x128xf32> to vector<8x32xf32>
    %cst_119 = arith.constant 5.000000e-01 : f32
    %346 = vector.broadcast %cst_119 : f32 to vector<8x32xf32>
    %347 = arith.mulf %345, %346 : vector<8x32xf32>
    %cst_120 = arith.constant 5.000000e-01 : f32
    %348 = vector.broadcast %cst_120 : f32 to vector<8x32xf32>
    %349 = arith.addf %347, %348 : vector<8x32xf32>
    %350 = vector.extract_strided_slice %339 {offsets = [0, 64], sizes = [8, 32], strides = [1, 1]} : vector<8x128xf32> to vector<8x32xf32>
    %351 = vector.extract_strided_slice %339 {offsets = [0, 96], sizes = [8, 32], strides = [1, 1]} : vector<8x128xf32> to vector<8x32xf32>
    %cst_121 = arith.constant 5.000000e-01 : f32
    %352 = vector.broadcast %cst_121 : f32 to vector<8x32xf32>
    %353 = arith.mulf %351, %352 : vector<8x32xf32>
    %cst_122 = arith.constant 5.000000e-01 : f32
    %354 = vector.broadcast %cst_122 : f32 to vector<8x32xf32>
    %355 = arith.addf %353, %354 : vector<8x32xf32>
    %356 = arith.mulf %349, %303 : vector<8x32xf32>
    %357 = arith.mulf %344, %350 : vector<8x32xf32>
    %358 = arith.addf %356, %357 : vector<8x32xf32>
    %359 = math.tanh %358 : vector<8x32xf32>
    %360 = arith.mulf %355, %359 : vector<8x32xf32>
    %c6_i32 = arith.constant 6 : i32
    %361 = tpu.concatenate %338, %360 in 1 : vector<8x32xf32>, vector<8x32xf32> -> vector<8x64xf32>
    %362 = arith.truncf %361 : vector<8x64xf32> to vector<8x64xbf16>
    %c0_123 = arith.constant 0 : index
    %c0_124 = arith.constant 0 : index
    %363 = vector.load %arg3[%c0_123, %c0_124] : memref<64x256xbf16, #tpu.memory_space<vmem>>, vector<64x256xbf16>
    %cst_125 = arith.constant dense<0.000000e+00> : vector<8x256xf32>
    %364 = tpu.matmul %362, %363, %cst_125 {dimension_numbers = #tpu.dot_dimension_numbers<[1], [0], [0], [1], [0, 0, 1, 1], [], []>} : vector<8x64xbf16>, vector<64x256xbf16>, vector<8x256xf32> -> vector<8x256xf32>
    %c1_i32_126 = arith.constant 1 : i32
    %365 = arith.addi %c6_i32, %c1_i32_126 : i32
    %c8_i32_127 = arith.constant 8 : i32
    %366 = arith.muli %365, %c8_i32_127 : i32
    %367 = tpu.assume_multiple %366, 8 : i32
    %368 = arith.index_cast %367 : i32 to index
    %c0_128 = arith.constant 0 : index
    %369 = vector.load %arg7[%368, %c0_128] : memref<64x256xf32, #tpu.memory_space<vmem>>, vector<8x256xf32>
    %370 = arith.addf %364, %369 : vector<8x256xf32>
    %371 = math.tanh %370 : vector<8x256xf32>
    %372 = vector.extract_strided_slice %371 {offsets = [0, 0], sizes = [8, 128], strides = [1, 1]} : vector<8x256xf32> to vector<8x128xf32>
    %373 = vector.extract_strided_slice %372 {offsets = [0, 0], sizes = [8, 32], strides = [1, 1]} : vector<8x128xf32> to vector<8x32xf32>
    %cst_129 = arith.constant 5.000000e-01 : f32
    %374 = vector.broadcast %cst_129 : f32 to vector<8x32xf32>
    %375 = arith.mulf %373, %374 : vector<8x32xf32>
    %cst_130 = arith.constant 5.000000e-01 : f32
    %376 = vector.broadcast %cst_130 : f32 to vector<8x32xf32>
    %377 = arith.addf %375, %376 : vector<8x32xf32>
    %378 = vector.extract_strided_slice %372 {offsets = [0, 32], sizes = [8, 32], strides = [1, 1]} : vector<8x128xf32> to vector<8x32xf32>
    %cst_131 = arith.constant 5.000000e-01 : f32
    %379 = vector.broadcast %cst_131 : f32 to vector<8x32xf32>
    %380 = arith.mulf %378, %379 : vector<8x32xf32>
    %cst_132 = arith.constant 5.000000e-01 : f32
    %381 = vector.broadcast %cst_132 : f32 to vector<8x32xf32>
    %382 = arith.addf %380, %381 : vector<8x32xf32>
    %383 = vector.extract_strided_slice %372 {offsets = [0, 64], sizes = [8, 32], strides = [1, 1]} : vector<8x128xf32> to vector<8x32xf32>
    %384 = vector.extract_strided_slice %372 {offsets = [0, 96], sizes = [8, 32], strides = [1, 1]} : vector<8x128xf32> to vector<8x32xf32>
    %cst_133 = arith.constant 5.000000e-01 : f32
    %385 = vector.broadcast %cst_133 : f32 to vector<8x32xf32>
    %386 = arith.mulf %384, %385 : vector<8x32xf32>
    %cst_134 = arith.constant 5.000000e-01 : f32
    %387 = vector.broadcast %cst_134 : f32 to vector<8x32xf32>
    %388 = arith.addf %386, %387 : vector<8x32xf32>
    %389 = arith.mulf %382, %336 : vector<8x32xf32>
    %390 = arith.mulf %377, %383 : vector<8x32xf32>
    %391 = arith.addf %389, %390 : vector<8x32xf32>
    %392 = math.tanh %391 : vector<8x32xf32>
    %393 = arith.mulf %388, %392 : vector<8x32xf32>
    %394 = vector.extract_strided_slice %371 {offsets = [0, 128], sizes = [8, 128], strides = [1, 1]} : vector<8x256xf32> to vector<8x128xf32>
    %395 = vector.extract_strided_slice %394 {offsets = [0, 0], sizes = [8, 32], strides = [1, 1]} : vector<8x128xf32> to vector<8x32xf32>
    %cst_135 = arith.constant 5.000000e-01 : f32
    %396 = vector.broadcast %cst_135 : f32 to vector<8x32xf32>
    %397 = arith.mulf %395, %396 : vector<8x32xf32>
    %cst_136 = arith.constant 5.000000e-01 : f32
    %398 = vector.broadcast %cst_136 : f32 to vector<8x32xf32>
    %399 = arith.addf %397, %398 : vector<8x32xf32>
    %400 = vector.extract_strided_slice %394 {offsets = [0, 32], sizes = [8, 32], strides = [1, 1]} : vector<8x128xf32> to vector<8x32xf32>
    %cst_137 = arith.constant 5.000000e-01 : f32
    %401 = vector.broadcast %cst_137 : f32 to vector<8x32xf32>
    %402 = arith.mulf %400, %401 : vector<8x32xf32>
    %cst_138 = arith.constant 5.000000e-01 : f32
    %403 = vector.broadcast %cst_138 : f32 to vector<8x32xf32>
    %404 = arith.addf %402, %403 : vector<8x32xf32>
    %405 = vector.extract_strided_slice %394 {offsets = [0, 64], sizes = [8, 32], strides = [1, 1]} : vector<8x128xf32> to vector<8x32xf32>
    %406 = vector.extract_strided_slice %394 {offsets = [0, 96], sizes = [8, 32], strides = [1, 1]} : vector<8x128xf32> to vector<8x32xf32>
    %cst_139 = arith.constant 5.000000e-01 : f32
    %407 = vector.broadcast %cst_139 : f32 to vector<8x32xf32>
    %408 = arith.mulf %406, %407 : vector<8x32xf32>
    %cst_140 = arith.constant 5.000000e-01 : f32
    %409 = vector.broadcast %cst_140 : f32 to vector<8x32xf32>
    %410 = arith.addf %408, %409 : vector<8x32xf32>
    %411 = arith.mulf %404, %358 : vector<8x32xf32>
    %412 = arith.mulf %399, %405 : vector<8x32xf32>
    %413 = arith.addf %411, %412 : vector<8x32xf32>
    %414 = math.tanh %413 : vector<8x32xf32>
    %415 = arith.mulf %410, %414 : vector<8x32xf32>
    %c7_i32 = arith.constant 7 : i32
    %416 = tpu.concatenate %393, %415 in 1 : vector<8x32xf32>, vector<8x32xf32> -> vector<8x64xf32>
    %417 = arith.truncf %416 : vector<8x64xf32> to vector<8x64xbf16>
    %c0_141 = arith.constant 0 : index
    %c128 = arith.constant 128 : index
    %418 = vector.load %arg3[%c0_141, %c128] : memref<64x256xbf16, #tpu.memory_space<vmem>>, vector<64x128xbf16>
    %cst_142 = arith.constant dense<0.000000e+00> : vector<8x128xf32>
    %419 = tpu.matmul %417, %418, %cst_142 {dimension_numbers = #tpu.dot_dimension_numbers<[1], [0], [0], [1], [0, 0, 1, 1], [], []>} : vector<8x64xbf16>, vector<64x128xbf16>, vector<8x128xf32> -> vector<8x128xf32>
    %c0_143 = arith.constant 0 : index
    %c128_144 = arith.constant 128 : index
    %420 = vector.load %arg2[%c0_143, %c128_144] : memref<1x256xf32, #tpu.memory_space<vmem>>, vector<1x128xf32>
    %421 = vector.broadcast %420 : vector<1x128xf32> to vector<8x128xf32>
    %422 = arith.addf %419, %421 : vector<8x128xf32>
    %423 = math.tanh %422 : vector<8x128xf32>
    %424 = vector.extract_strided_slice %423 {offsets = [0, 0], sizes = [8, 32], strides = [1, 1]} : vector<8x128xf32> to vector<8x32xf32>
    %cst_145 = arith.constant 5.000000e-01 : f32
    %425 = vector.broadcast %cst_145 : f32 to vector<8x32xf32>
    %426 = arith.mulf %424, %425 : vector<8x32xf32>
    %cst_146 = arith.constant 5.000000e-01 : f32
    %427 = vector.broadcast %cst_146 : f32 to vector<8x32xf32>
    %428 = arith.addf %426, %427 : vector<8x32xf32>
    %429 = vector.extract_strided_slice %423 {offsets = [0, 32], sizes = [8, 32], strides = [1, 1]} : vector<8x128xf32> to vector<8x32xf32>
    %cst_147 = arith.constant 5.000000e-01 : f32
    %430 = vector.broadcast %cst_147 : f32 to vector<8x32xf32>
    %431 = arith.mulf %429, %430 : vector<8x32xf32>
    %cst_148 = arith.constant 5.000000e-01 : f32
    %432 = vector.broadcast %cst_148 : f32 to vector<8x32xf32>
    %433 = arith.addf %431, %432 : vector<8x32xf32>
    %434 = vector.extract_strided_slice %423 {offsets = [0, 64], sizes = [8, 32], strides = [1, 1]} : vector<8x128xf32> to vector<8x32xf32>
    %435 = vector.extract_strided_slice %423 {offsets = [0, 96], sizes = [8, 32], strides = [1, 1]} : vector<8x128xf32> to vector<8x32xf32>
    %cst_149 = arith.constant 5.000000e-01 : f32
    %436 = vector.broadcast %cst_149 : f32 to vector<8x32xf32>
    %437 = arith.mulf %435, %436 : vector<8x32xf32>
    %cst_150 = arith.constant 5.000000e-01 : f32
    %438 = vector.broadcast %cst_150 : f32 to vector<8x32xf32>
    %439 = arith.addf %437, %438 : vector<8x32xf32>
    %440 = arith.mulf %433, %413 : vector<8x32xf32>
    %441 = arith.mulf %428, %434 : vector<8x32xf32>
    %442 = arith.addf %440, %441 : vector<8x32xf32>
    %443 = math.tanh %442 : vector<8x32xf32>
    %444 = arith.mulf %439, %443 : vector<8x32xf32>
    %c0_151 = arith.constant 0 : index
    %c0_152 = arith.constant 0 : index
    %445 = vector.load %arg4[%c0_151, %c0_152] : memref<32x4xf32, #tpu.memory_space<vmem>>, vector<32x4xf32>
    %cst_153 = arith.constant dense<0.000000e+00> : vector<8x4xf32>
    %446 = tpu.matmul %444, %445, %cst_153 {dimension_numbers = #tpu.dot_dimension_numbers<[1], [0], [0], [1], [0, 0, 1, 1], [], []>} : vector<8x32xf32>, vector<32x4xf32>, vector<8x4xf32> -> vector<8x4xf32>
    %c0_154 = arith.constant 0 : index
    %c0_155 = arith.constant 0 : index
    %447 = vector.load %arg5[%c0_154, %c0_155] : memref<1x4xf32, #tpu.memory_space<vmem>>, vector<1x4xf32>
    %448 = vector.broadcast %447 : vector<1x4xf32> to vector<8x4xf32>
    %449 = arith.addf %446, %448 : vector<8x4xf32>
    %cst_156 = arith.constant dense<0xFF800000> : vector<8xf32>
    %450 = vector.multi_reduction <maximumf>, %449, %cst_156 [1] : vector<8x4xf32> to vector<8xf32>
    %451 = vector.shape_cast %450 : vector<8xf32> to vector<8x1xf32>
    %452 = vector.broadcast %451 : vector<8x1xf32> to vector<8x4xf32>
    %453 = arith.subf %449, %452 : vector<8x4xf32>
    %454 = math.exp %453 : vector<8x4xf32>
    %cst_157 = arith.constant dense<0.000000e+00> : vector<8xf32>
    %455 = vector.multi_reduction <add>, %454, %cst_157 [1] : vector<8x4xf32> to vector<8xf32>
    %456 = vector.shape_cast %455 : vector<8xf32> to vector<8x1xf32>
    %457 = vector.broadcast %456 : vector<8x1xf32> to vector<8x4xf32>
    %458 = arith.divf %454, %457 : vector<8x4xf32>
    %c0_158 = arith.constant 0 : index
    %c0_159 = arith.constant 0 : index
    %459 = vector.load %arg6[%c0_158, %c0_159] : memref<8x4xf32, #tpu.memory_space<vmem>>, vector<8x4xf32>
    tpu.vector_store %arg6[%c0_158, %c0_159], %458 {strides = array<i32>} : memref<8x4xf32, #tpu.memory_space<vmem>>, vector<8x4xf32>,
    return
  }
}

</mosaic_0001>

<llo_original>
// kernel: tpu_custom_call.1
$region0: #{tpu_custom_call.1}
  #allocation0 [shape = 'u32[]', space=smem, size = 0x4, offset = 0x4, fixed_abs, tag = 'smem constant byte address 0x4 - core index']
  #allocation1 [shape = 'u32[144,128]{1,0:T(1,128)}', space=vmem, size = 0x12000, scoped, tag = 'internal scratch']
  #allocation2 [shape = 'f32[64,256]{1,0:T(8,128)}', space=vmem, size = 0x10000, scoped, tag = 'scratch operand']
  %s0 = inlined_call_operand.vmem [shape: bf16[64,13], index: 0, kind: input, shape index: {}]
  %s1 = inlined_call_operand.vmem [shape: bf16[13,256], index: 1, kind: input, shape index: {}]
  %s2 = inlined_call_operand.hbm [shape: f32[1,256], index: 2, kind: input, shape index: {}]
  %s3 = inlined_call_operand.vmem [shape: bf16[64,256], index: 3, kind: input, shape index: {}]
  %s4 = inlined_call_operand.vmem [shape: f32[32,4], index: 4, kind: input, shape index: {}]
  %s5 = inlined_call_operand.vmem [shape: f32[1,4], index: 5, kind: input, shape index: {}]
  %s6 = inlined_call_operand.vmem [shape: f32[8,4], index: 6, kind: output, shape index: {}]
  %s7 = sld [smem:[#allocation0]]
  $region38: #{tpu_custom_call.1} parent=0
    _
  %s9 = ssub.s32 1, %s7
  %s10 = scalar_select 0, %s9, %s7
  $region1: #{tpu_custom_call.1} parent=0
    #allocation3 [shape = 'u8[1024]{0}', space=vmem, size = 0x400, scoped, tag = 'input window, operand 2, single buffered']
    #allocation4 [shape = 's32[1]{0}', space=sflag, size = 0x4, scoped, tag = 'scoped memory for tpu_custom_call.1']
    %11 = vsyncpa [#allocation4], 0
    // Predicated region
    $region2: #{tpu_custom_call.1} parent=1 // pred_check
      _
    $region3: #{tpu_custom_call.1} parent=1 // pred_check_branch
      %13 = sbr.rel (0) target = $region5
    $region4: #{tpu_custom_call.1} parent=1 // pred_region
      _
    $region5: #{tpu_custom_call.1} parent=1 // pred_fallthru
      _
    // Predicated region
    $region6: #{tpu_custom_call.1} parent=1 // pred_check
      _
    $region7: #{tpu_custom_call.1} parent=1 // pred_check_branch
      %15 = sbr.rel (0) target = $region9
    $region8: #{tpu_custom_call.1} parent=1 // pred_region
      _
    $region9: #{tpu_custom_call.1} parent=1 // pred_fallthru
      _
    // Predicated region
    $region10: #{tpu_custom_call.1} parent=1 // pred_check
      _
    $region11: #{tpu_custom_call.1} parent=1 // pred_check_branch
      %17 = sbr.rel (0) target = $region13
    $region12: #{tpu_custom_call.1} parent=1 // pred_region
      %s19 = ssub.s32 32, 32
      %20 = vsyncadd [#allocation4], %s19
      %s22 = sshll.u32 [#allocation3], 4
      %s23 = int_to_ptr.vmem [resolvable:$true] %s22
      %25 = dma.hbm_to_vmem [thread:$0]  %s2, 32, %s23, [#allocation4]
    $region13: #{tpu_custom_call.1} parent=1 // pred_fallthru
      _
    // Predicated region
    $region14: #{tpu_custom_call.1} parent=1 // pred_check
      _
    $region15: #{tpu_custom_call.1} parent=1 // pred_check_branch
      %27 = sbr.rel (0) target = $region17
    $region16: #{tpu_custom_call.1} parent=1 // pred_region
      _
    $region17: #{tpu_custom_call.1} parent=1 // pred_fallthru
      _
    // Predicated region
    $region18: #{tpu_custom_call.1} parent=1 // pred_check
      _
    $region19: #{tpu_custom_call.1} parent=1 // pred_check_branch
      %29 = sbr.rel (0) target = $region21
    $region20: #{tpu_custom_call.1} parent=1 // pred_region
      _
    $region21: #{tpu_custom_call.1} parent=1 // pred_fallthru
      _
    // Predicated region
    $region22: #{tpu_custom_call.1} parent=1 // pred_check
      _
    $region23: #{tpu_custom_call.1} parent=1 // pred_check_branch
      %31 = sbr.rel (0) target = $region25
    $region24: #{tpu_custom_call.1} parent=1 // pred_region
      _
    $region25: #{tpu_custom_call.1} parent=1 // pred_fallthru
      _
    // Predicated region
    $region26: #{tpu_custom_call.1} parent=1 // pred_check
      _
    $region27: #{tpu_custom_call.1} parent=1 // pred_check_branch
      %33 = sbr.rel (0) target = $region29
    $region28: #{tpu_custom_call.1} parent=1 // pred_region
      %34 = dma.done [#allocation4], 32
    $region29: #{tpu_custom_call.1} parent=1 // pred_fallthru
      _
    %v36 = vld [vmem:[%s0] sm:$0xf]
    %v37 = vld [vmem:[%s0 + $0x4] sm:$0xf]
    %v38 = vld [vmem:[%s0 + $0x8] sm:$0xf]
    %v39 = vld [vmem:[%s0 + $0xc] sm:$0xf]
    %v40 = vld [vmem:[%s0 + $0x10] sm:$0xf]
    %v41 = vld [vmem:[%s0 + $0x14] sm:$0xf]
    %v42 = vld [vmem:[%s0 + $0x18] sm:$0xf]
    %v43 = vld [vmem:[%s0 + $0x1c] sm:$0xf]
    %v44 = vld [vmem:[%s1] sm:$0xff]
    %v45 = vld [vmem:[%s1 + $0x8] sm:$0x77]
    %v46 = vld [vmem:[#allocation3] sm:$0x3]
    %v48 = vlaneseq
    %v49 = vshrl.u32 %v48, 7
    %v50 = vsub.s32 0, %v49
    %v51 = vrot.slane %v46, %v50
    %v52 = vlaneseq
    %v53 = vshrl.u32 %v52, 7
    %v54 = vsub.s32 1, %v53
    %v55 = vrot.slane %v46, %v54
    %v66 = vunpack.c.l.b16 %v36
    %v67 = vunpack.c.l.b16 %v37
    %v68 = vunpack.c.l.b16 %v38
    %v69 = vunpack.c.l.b16 %v39
    %v70 = vunpack.c.l.b16 %v40
    %v71 = vunpack.c.l.b16 %v41
    %v72 = vunpack.c.l.b16 %v42
    %v73 = vunpack.c.l.b16 %v43
    %v74 = vpack.c.b16 %v67, %v66
    %v75 = vpack.c.b16 %v69, %v68
    %v76 = vpack.c.b16 %v71, %v70
    %v77 = vpack.c.b16 %v73, %v72
    %v80 = vunpack.c.l.b16 %v44
    %v81 = vunpack.c.h.b16 %v44
    %v82 = vunpack.c.l.b16 %v45
    %v83 = vunpack.c.h.b16 %v45
    %v84 = vpack.c.b16 %v82, %v80
    %v85 = vpack.c.b16 %v83, %v81
    %vm86 = vcmask 105472
    %v88 = vsel %vm86, %v74, 0
    %v91 = vsel %vm86, %v75, 0
    %v94 = vsel %vm86, %v76, 0
    %v97 = vsel %vm86, %v77, 0
    %vm99 = vcmask 1045504
    %vm100 = vcmask 1046528
    %v101 = vsel %vm99, 4294967295, 65535
    %v102 = vsel %vm100, %v101, 0
    %v104 = vand.u32 %v84, %v102
    %v107 = vand.u32 %v85, %v102
    %109 = vmatprep.subr.bf16.mxu0 0
    %110 = vmatpush1.bf16.msra.mxu0 0
    %111 = vmatprep.subr.bf16.mxu0 0
    %112 = vmatpush1.bf16.msra.mxu0 0
    %113 = vmatprep.subr.bf16.mxu0 0
    %114 = vmatpush1.bf16.msra.mxu0 0
    %115 = vmatprep.subr.bf16.mxu0 0
    %116 = vmatpush1.bf16.msra.mxu0 0
    %117 = vmatprep.subr.bf16.mxu0 0
    %118 = vmatpush1.bf16.msra.mxu0 0
    %119 = vmatprep.subr.bf16.mxu0 0
    %120 = vmatpush1.bf16.msra.mxu0 0
    %121 = vmatprep.subr.bf16.mxu0 0
    %122 = vmatpush1.bf16.msra.mxu0 0
    %123 = vmatprep.subr.bf16.mxu0 %v107
    %124 = vmatpush1.bf16.msra.mxu0 %v104
    %125 = vmatprep.subr.bf16.mxu0 0
    %126 = vmatpush2.bf16.msra.mxu0 0
    %127 = vmatprep.subr.bf16.mxu0 0
    %128 = vmatpush2.bf16.msra.mxu0 0
    %129 = vmatprep.subr.bf16.mxu0 0
    %130 = vmatpush2.bf16.msra.mxu0 0
    %131 = vmatprep.subr.bf16.mxu0 0
    %132 = vmatpush2.bf16.msra.mxu0 0
    %133 = vmatprep.subr.bf16.mxu0 0
    %134 = vmatpush2.bf16.msra.mxu0 0
    %135 = vmatprep.subr.bf16.mxu0 0
    %136 = vmatpush2.bf16.msra.mxu0 0
    %137 = vmatprep.subr.bf16.mxu0 0
    %138 = vmatpush2.bf16.msra.mxu0 0
    %139 = vmatprep.subr.bf16.mxu0 0
    %140 = vmatpush2.bf16.msra.mxu0 0
    %141 = vmatprep.mubr.bf16.mxu0 0
    %142 = vmatmul.mubr.bf16.gmra.mxu0 %v88
    %v143 = vpop.f32.mrf.mxu0
    %v144 = vadd.f32 %v51, %v143
    %v145 = vpop.f32.mrf.mxu0
    %v146 = vadd.f32 %v55, %v145
    %v147 = vpop.f32.mrf.mxu0
    %v148 = vadd.f32 %v51, %v147
    %v149 = vpop.f32.mrf.mxu0
    %v150 = vadd.f32 %v55, %v149
    %151 = vmatprep.mubr.bf16.mxu0 0
    %152 = vmatmul.mubr.bf16.gmra.mxu0 %v91
    %v153 = vpop.f32.mrf.mxu0
    %v154 = vadd.f32 %v51, %v153
    %v155 = vpop.f32.mrf.mxu0
    %v156 = vadd.f32 %v55, %v155
    %v157 = vpop.f32.mrf.mxu0
    %v158 = vadd.f32 %v51, %v157
    %v159 = vpop.f32.mrf.mxu0
    %v160 = vadd.f32 %v55, %v159
    %161 = vmatprep.mubr.bf16.mxu0 0
    %162 = vmatmul.mubr.bf16.gmra.mxu0 %v94
    %v163 = vpop.f32.mrf.mxu0
    %v164 = vadd.f32 %v51, %v163
    %v165 = vpop.f32.mrf.mxu0
    %v166 = vadd.f32 %v55, %v165
    %v167 = vpop.f32.mrf.mxu0
    %v168 = vadd.f32 %v51, %v167
    %v169 = vpop.f32.mrf.mxu0
    %v170 = vadd.f32 %v55, %v169
    %171 = vmatprep.mubr.bf16.mxu0 0
    %172 = vmatmul.mubr.bf16.gmra.mxu0 %v97
    %v173 = vpop.f32.mrf.mxu0
    %v174 = vadd.f32 %v51, %v173
    %v175 = vpop.f32.mrf.mxu0
    %v176 = vadd.f32 %v55, %v175
    %v177 = vpop.f32.mrf.mxu0
    %v178 = vadd.f32 %v51, %v177
    %v179 = vpop.f32.mrf.mxu0
    %v180 = vadd.f32 %v55, %v179
    %181 = vdwg.mxu0
    %182 = vst [vmem:[#allocation2] sm:$0xff] %v144
    %183 = vst [vmem:[#allocation2 + $0x8] sm:$0xff] %v146
    %184 = vst [vmem:[#allocation2 + $0x10] sm:$0xff] %v148
    %185 = vst [vmem:[#allocation2 + $0x18] sm:$0xff] %v150
    %186 = vst [vmem:[#allocation2 + $0x20] sm:$0xff] %v154
    %187 = vst [vmem:[#allocation2 + $0x28] sm:$0xff] %v156
    %188 = vst [vmem:[#allocation2 + $0x30] sm:$0xff] %v158
    %189 = vst [vmem:[#allocation2 + $0x38] sm:$0xff] %v160
    %190 = vst [vmem:[#allocation2 + $0x40] sm:$0xff] %v164
    %191 = vst [vmem:[#allocation2 + $0x48] sm:$0xff] %v166
    %192 = vst [vmem:[#allocation2 + $0x50] sm:$0xff] %v168
    %193 = vst [vmem:[#allocation2 + $0x58] sm:$0xff] %v170
    %194 = vst [vmem:[#allocation2 + $0x60] sm:$0xff] %v174
    %195 = vst [vmem:[#allocation2 + $0x68] sm:$0xff] %v176
    %196 = vst [vmem:[#allocation2 + $0x70] sm:$0xff] %v178
    %197 = vst [vmem:[#allocation2 + $0x78] sm:$0xff] %v180
    %v198 = vld [vmem:[#allocation2] sm:$0xff]
    %v199 = vtanh.pop %v198
    %v200 = vmul.f32 %v199, 0.5
    %v201 = vadd.f32 %v200, 0.5
    %v202 = vmul.f32 %v201, 0.0
    %204 = vrot.lane.b32.xlu0 %v199, 64
    %v205 = vpop.permute.xlu0 %204
    %v207 = vmul.f32 %v201, %v205
    %209 = vrot.lane.b32.xlu0 %v207, 32
    %v210 = vpop.permute.xlu0 %209
    %v212 = vadd.f32 %v202, %v210
    %v213 = vtanh.pop %v212
    %215 = vrot.lane.b32.xlu0 %v213, 64
    %v216 = vpop.permute.xlu0 %215
    %v218 = vmul.f32 %v201, %v216
    %220 = vrot.lane.b32.xlu0 %v218, 32
    %v221 = vpop.permute.xlu0 %220
    %vm223 = vcmask 261120
    %v224 = vsel %vm223, %v221, 0.0
    %v225 = vpack.c.bf16 %v224, %v224
    %v226 = vld [vmem:[%s3] sm:$0xff]
    %v227 = vld [vmem:[%s3 + $0x8] sm:$0xff]
    %v228 = vld [vmem:[%s3 + $0x10] sm:$0xff]
    %v229 = vld [vmem:[%s3 + $0x18] sm:$0xff]
    %v230 = vld [vmem:[%s3 + $0x20] sm:$0xff]
    %v231 = vld [vmem:[%s3 + $0x28] sm:$0xff]
    %v232 = vld [vmem:[%s3 + $0x30] sm:$0xff]
    %v233 = vld [vmem:[%s3 + $0x38] sm:$0xff]
    %s234 = smul.u32 1, 2
    %s235 = smul.addr %s234, 8
    %s236 = scalar_lea.vmem [#allocation2], %s235
    %v237 = vld [vmem:[%s236] sm:$0xff]
    %v238 = vld [vmem:[%s236 + $0x8] sm:$0xff]
    %v247 = vunpack.c.l.b16 %v226
    %v248 = vunpack.c.h.b16 %v226
    %v249 = vunpack.c.l.b16 %v227
    %v250 = vunpack.c.h.b16 %v227
    %v251 = vunpack.c.l.b16 %v228
    %v252 = vunpack.c.h.b16 %v228
    %v253 = vunpack.c.l.b16 %v229
    %v254 = vunpack.c.h.b16 %v229
    %v255 = vunpack.c.l.b16 %v230
    %v256 = vunpack.c.h.b16 %v230
    %v257 = vunpack.c.l.b16 %v231
    %v258 = vunpack.c.h.b16 %v231
    %v259 = vunpack.c.l.b16 %v232
    %v260 = vunpack.c.h.b16 %v232
    %v261 = vunpack.c.l.b16 %v233
    %v262 = vunpack.c.h.b16 %v233
    %v263 = vpack.c.b16 %v249, %v247
    %v264 = vpack.c.b16 %v250, %v248
    %v265 = vpack.c.b16 %v253, %v251
    %v266 = vpack.c.b16 %v254, %v252
    %v267 = vpack.c.b16 %v257, %v255
    %v268 = vpack.c.b16 %v258, %v256
    %v269 = vpack.c.b16 %v261, %v259
    %v270 = vpack.c.b16 %v262, %v260
    %vm279 = vcmask 523264
    %v281 = vsel %vm279, %v225, 0
    %283 = vmatprep.subr.bf16.mxu0 0
    %284 = vmatpush1.bf16.msra.mxu0 0
    %285 = vmatprep.subr.bf16.mxu0 0
    %286 = vmatpush1.bf16.msra.mxu0 0
    %287 = vmatprep.subr.bf16.mxu0 0
    %288 = vmatpush1.bf16.msra.mxu0 0
    %289 = vmatprep.subr.bf16.mxu0 0
    %290 = vmatpush1.bf16.msra.mxu0 0
    %291 = vmatprep.subr.bf16.mxu0 %v270
    %292 = vmatpush1.bf16.msra.mxu0 %v269
    %293 = vmatprep.subr.bf16.mxu0 %v268
    %294 = vmatpush1.bf16.msra.mxu0 %v267
    %295 = vmatprep.subr.bf16.mxu0 %v266
    %296 = vmatpush1.bf16.msra.mxu0 %v265
    %297 = vmatprep.subr.bf16.mxu0 %v264
    %298 = vmatpush1.bf16.msra.mxu0 %v263
    %299 = vmatprep.subr.bf16.mxu0 0
    %300 = vmatpush2.bf16.msra.mxu0 0
    %301 = vmatprep.subr.bf16.mxu0 0
    %302 = vmatpush2.bf16.msra.mxu0 0
    %303 = vmatprep.subr.bf16.mxu0 0
    %304 = vmatpush2.bf16.msra.mxu0 0
    %305 = vmatprep.subr.bf16.mxu0 0
    %306 = vmatpush2.bf16.msra.mxu0 0
    %307 = vmatprep.subr.bf16.mxu0 0
    %308 = vmatpush2.bf16.msra.mxu0 0
    %309 = vmatprep.subr.bf16.mxu0 0
    %310 = vmatpush2.bf16.msra.mxu0 0
    %311 = vmatprep.subr.bf16.mxu0 0
    %312 = vmatpush2.bf16.msra.mxu0 0
    %313 = vmatprep.subr.bf16.mxu0 0
    %314 = vmatpush2.bf16.msra.mxu0 0
    %315 = vmatprep.mubr.bf16.mxu0 0
    %316 = vmatmul.mubr.bf16.gmra.mxu0 %v281
    %v317 = vpop.f32.mrf.mxu0
    %v318 = vadd.f32 %v237, %v317
    %v319 = vpop.f32.mrf.mxu0
    %v320 = vadd.f32 %v238, %v319
    %v321 = vpop.f32.mrf.mxu0
    %v322 = vpop.f32.mrf.mxu0
    %323 = vdwg.mxu0
    %v324 = vtanh.pop %v318
    %v325 = vtanh.pop %v320
    %v326 = vmul.f32 %v324, 0.5
    %v327 = vadd.f32 %v326, 0.5
    %v328 = vmul.f32 %v327, %v212
    %330 = vrot.lane.b32.xlu0 %v324, 64
    %v331 = vpop.permute.xlu0 %330
    %v333 = vmul.f32 %v327, %v331
    %335 = vrot.lane.b32.xlu0 %v333, 32
    %v336 = vpop.permute.xlu0 %335
    %v338 = vadd.f32 %v328, %v336
    %v339 = vtanh.pop %v338
    %341 = vrot.lane.b32.xlu0 %v339, 64
    %v342 = vpop.permute.xlu0 %341
    %v344 = vmul.f32 %v327, %v342
    %v345 = vmul.f32 %v325, 0.5
    %v346 = vadd.f32 %v345, 0.5
    %v347 = vmul.f32 %v346, 0.0
    %349 = vrot.lane.b32.xlu0 %v325, 64
    %v350 = vpop.permute.xlu0 %349
    %v352 = vmul.f32 %v346, %v350
    %354 = vrot.lane.b32.xlu0 %v352, 32
    %v355 = vpop.permute.xlu0 %354
    %v357 = vadd.f32 %v347, %v355
    %v358 = vtanh.pop %v357
    %360 = vrot.lane.b32.xlu0 %v358, 64
    %v361 = vpop.permute.xlu0 %360
    %v363 = vmul.f32 %v346, %v361
    %365 = vrot.lane.b32.xlu0 %v344, 32
    %v366 = vpop.permute.xlu0 %365
    %369 = vrot.lane.b32.xlu0 %v363, 64
    %v370 = vpop.permute.xlu0 %369
    %v372 = vsel %vm223, %v366, %v370
    %v373 = vpack.c.bf16 %v372, %v372
    %s374 = smul.u32 2, 2
    %s375 = smul.addr %s374, 8
    %s376 = scalar_lea.vmem [#allocation2], %s375
    %v377 = vld [vmem:[%s376] sm:$0xff]
    %v378 = vld [vmem:[%s376 + $0x8] sm:$0xff]
    %v380 = vsel %vm279, %v373, 0
    %382 = vmatprep.subr.bf16.mxu0 0
    %383 = vmatpush1.bf16.msra.mxu0 0
    %384 = vmatprep.subr.bf16.mxu0 0
    %385 = vmatpush1.bf16.msra.mxu0 0
    %386 = vmatprep.subr.bf16.mxu0 0
    %387 = vmatpush1.bf16.msra.mxu0 0
    %388 = vmatprep.subr.bf16.mxu0 0
    %389 = vmatpush1.bf16.msra.mxu0 0
    %390 = vmatprep.subr.bf16.mxu0 %v270
    %391 = vmatpush1.bf16.msra.mxu0 %v269
    %392 = vmatprep.subr.bf16.mxu0 %v268
    %393 = vmatpush1.bf16.msra.mxu0 %v267
    %394 = vmatprep.subr.bf16.mxu0 %v266
    %395 = vmatpush1.bf16.msra.mxu0 %v265
    %396 = vmatprep.subr.bf16.mxu0 %v264
    %397 = vmatpush1.bf16.msra.mxu0 %v263
    %398 = vmatprep.subr.bf16.mxu0 0
    %399 = vmatpush2.bf16.msra.mxu0 0
    %400 = vmatprep.subr.bf16.mxu0 0
    %401 = vmatpush2.bf16.msra.mxu0 0
    %402 = vmatprep.subr.bf16.mxu0 0
    %403 = vmatpush2.bf16.msra.mxu0 0
    %404 = vmatprep.subr.bf16.mxu0 0
    %405 = vmatpush2.bf16.msra.mxu0 0
    %406 = vmatprep.subr.bf16.mxu0 0
    %407 = vmatpush2.bf16.msra.mxu0 0
    %408 = vmatprep.subr.bf16.mxu0 0
    %409 = vmatpush2.bf16.msra.mxu0 0
    %410 = vmatprep.subr.bf16.mxu0 0
    %411 = vmatpush2.bf16.msra.mxu0 0
    %412 = vmatprep.subr.bf16.mxu0 0
    %413 = vmatpush2.bf16.msra.mxu0 0
    %414 = vmatprep.mubr.bf16.mxu0 0
    %415 = vmatmul.mubr.bf16.gmra.mxu0 %v380
    %v416 = vpop.f32.mrf.mxu0
    %v417 = vadd.f32 %v377, %v416
    %v418 = vpop.f32.mrf.mxu0
    %v419 = vadd.f32 %v378, %v418
    %v420 = vpop.f32.mrf.mxu0
    %v421 = vpop.f32.mrf.mxu0
    %422 = vdwg.mxu0
    %v423 = vtanh.pop %v417
    %v424 = vtanh.pop %v419
    %v425 = vmul.f32 %v423, 0.5
    %v426 = vadd.f32 %v425, 0.5
    %v427 = vmul.f32 %v426, %v338
    %429 = vrot.lane.b32.xlu0 %v423, 64
    %v430 = vpop.permute.xlu0 %429
    %v432 = vmul.f32 %v426, %v430
    %434 = vrot.lane.b32.xlu0 %v432, 32
    %v435 = vpop.permute.xlu0 %434
    %v437 = vadd.f32 %v427, %v435
    %v438 = vtanh.pop %v437
    %440 = vrot.lane.b32.xlu0 %v438, 64
    %v441 = vpop.permute.xlu0 %440
    %v443 = vmul.f32 %v426, %v441
    %v444 = vmul.f32 %v424, 0.5
    %v445 = vadd.f32 %v444, 0.5
    %v446 = vmul.f32 %v445, %v357
    %448 = vrot.lane.b32.xlu0 %v424, 64
    %v449 = vpop.permute.xlu0 %448
    %v451 = vmul.f32 %v445, %v449
    %453 = vrot.lane.b32.xlu0 %v451, 32
    %v454 = vpop.permute.xlu0 %453
    %v456 = vadd.f32 %v446, %v454
    %v457 = vtanh.pop %v456
    %459 = vrot.lane.b32.xlu0 %v457, 64
    %v460 = vpop.permute.xlu0 %459
    %v462 = vmul.f32 %v445, %v460
    %464 = vrot.lane.b32.xlu0 %v443, 32
    %v465 = vpop.permute.xlu0 %464
    %468 = vrot.lane.b32.xlu0 %v462, 64
    %v469 = vpop.permute.xlu0 %468
    %v471 = vsel %vm223, %v465, %v469
    %v472 = vpack.c.bf16 %v471, %v471
    %s473 = smul.u32 3, 2
    %s474 = smul.addr %s473, 8
    %s475 = scalar_lea.vmem [#allocation2], %s474
    %v476 = vld [vmem:[%s475] sm:$0xff]
    %v477 = vld [vmem:[%s475 + $0x8] sm:$0xff]
    %v479 = vsel %vm279, %v472, 0
    %481 = vmatprep.subr.bf16.mxu0 0
    %482 = vmatpush1.bf16.msra.mxu0 0
    %483 = vmatprep.subr.bf16.mxu0 0
    %484 = vmatpush1.bf16.msra.mxu0 0
    %485 = vmatprep.subr.bf16.mxu0 0
    %486 = vmatpush1.bf16.msra.mxu0 0
    %487 = vmatprep.subr.bf16.mxu0 0
    %488 = vmatpush1.bf16.msra.mxu0 0
    %489 = vmatprep.subr.bf16.mxu0 %v270
    %490 = vmatpush1.bf16.msra.mxu0 %v269
    %491 = vmatprep.subr.bf16.mxu0 %v268
    %492 = vmatpush1.bf16.msra.mxu0 %v267
    %493 = vmatprep.subr.bf16.mxu0 %v266
    %494 = vmatpush1.bf16.msra.mxu0 %v265
    %495 = vmatprep.subr.bf16.mxu0 %v264
    %496 = vmatpush1.bf16.msra.mxu0 %v263
    %497 = vmatprep.subr.bf16.mxu0 0
    %498 = vmatpush2.bf16.msra.mxu0 0
    %499 = vmatprep.subr.bf16.mxu0 0
    %500 = vmatpush2.bf16.msra.mxu0 0
    %501 = vmatprep.subr.bf16.mxu0 0
    %502 = vmatpush2.bf16.msra.mxu0 0
    %503 = vmatprep.subr.bf16.mxu0 0
    %504 = vmatpush2.bf16.msra.mxu0 0
    %505 = vmatprep.subr.bf16.mxu0 0
    %506 = vmatpush2.bf16.msra.mxu0 0
    %507 = vmatprep.subr.bf16.mxu0 0
    %508 = vmatpush2.bf16.msra.mxu0 0
    %509 = vmatprep.subr.bf16.mxu0 0
    %510 = vmatpush2.bf16.msra.mxu0 0
    %511 = vmatprep.subr.bf16.mxu0 0
    %512 = vmatpush2.bf16.msra.mxu0 0
    %513 = vmatprep.mubr.bf16.mxu0 0
    %514 = vmatmul.mubr.bf16.gmra.mxu0 %v479
    %v515 = vpop.f32.mrf.mxu0
    %v516 = vadd.f32 %v476, %v515
    %v517 = vpop.f32.mrf.mxu0
    %v518 = vadd.f32 %v477, %v517
    %v519 = vpop.f32.mrf.mxu0
    %v520 = vpop.f32.mrf.mxu0
    %521 = vdwg.mxu0
    %v522 = vtanh.pop %v516
    %v523 = vtanh.pop %v518
    %v524 = vmul.f32 %v522, 0.5
    %v525 = vadd.f32 %v524, 0.5
    %v526 = vmul.f32 %v525, %v437
    %528 = vrot.lane.b32.xlu0 %v522, 64
    %v529 = vpop.permute.xlu0 %528
    %v531 = vmul.f32 %v525, %v529
    %533 = vrot.lane.b32.xlu0 %v531, 32
    %v534 = vpop.permute.xlu0 %533
    %v536 = vadd.f32 %v526, %v534
    %v537 = vtanh.pop %v536
    %539 = vrot.lane.b32.xlu0 %v537, 64
    %v540 = vpop.permute.xlu0 %539
    %v542 = vmul.f32 %v525, %v540
    %v543 = vmul.f32 %v523, 0.5
    %v544 = vadd.f32 %v543, 0.5
    %v545 = vmul.f32 %v544, %v456
    %547 = vrot.lane.b32.xlu0 %v523, 64
    %v548 = vpop.permute.xlu0 %547
    %v550 = vmul.f32 %v544, %v548
    %552 = vrot.lane.b32.xlu0 %v550, 32
    %v553 = vpop.permute.xlu0 %552
    %v555 = vadd.f32 %v545, %v553
    %v556 = vtanh.pop %v555
    %558 = vrot.lane.b32.xlu0 %v556, 64
    %v559 = vpop.permute.xlu0 %558
    %v561 = vmul.f32 %v544, %v559
    %563 = vrot.lane.b32.xlu0 %v542, 32
    %v564 = vpop.permute.xlu0 %563
    %567 = vrot.lane.b32.xlu0 %v561, 64
    %v568 = vpop.permute.xlu0 %567
    %v570 = vsel %vm223, %v564, %v568
    %v571 = vpack.c.bf16 %v570, %v570
    %s572 = smul.u32 4, 2
    %s573 = smul.addr %s572, 8
    %s574 = scalar_lea.vmem [#allocation2], %s573
    %v575 = vld [vmem:[%s574] sm:$0xff]
    %v576 = vld [vmem:[%s574 + $0x8] sm:$0xff]
    %v578 = vsel %vm279, %v571, 0
    %580 = vmatprep.subr.bf16.mxu0 0
    %581 = vmatpush1.bf16.msra.mxu0 0
    %582 = vmatprep.subr.bf16.mxu0 0
    %583 = vmatpush1.bf16.msra.mxu0 0
    %584 = vmatprep.subr.bf16.mxu0 0
    %585 = vmatpush1.bf16.msra.mxu0 0
    %586 = vmatprep.subr.bf16.mxu0 0
    %587 = vmatpush1.bf16.msra.mxu0 0
    %588 = vmatprep.subr.bf16.mxu0 %v270
    %589 = vmatpush1.bf16.msra.mxu0 %v269
    %590 = vmatprep.subr.bf16.mxu0 %v268
    %591 = vmatpush1.bf16.msra.mxu0 %v267
    %592 = vmatprep.subr.bf16.mxu0 %v266
    %593 = vmatpush1.bf16.msra.mxu0 %v265
    %594 = vmatprep.subr.bf16.mxu0 %v264
    %595 = vmatpush1.bf16.msra.mxu0 %v263
    %596 = vmatprep.subr.bf16.mxu0 0
    %597 = vmatpush2.bf16.msra.mxu0 0
    %598 = vmatprep.subr.bf16.mxu0 0
    %599 = vmatpush2.bf16.msra.mxu0 0
    %600 = vmatprep.subr.bf16.mxu0 0
    %601 = vmatpush2.bf16.msra.mxu0 0
    %602 = vmatprep.subr.bf16.mxu0 0
    %603 = vmatpush2.bf16.msra.mxu0 0
    %604 = vmatprep.subr.bf16.mxu0 0
    %605 = vmatpush2.bf16.msra.mxu0 0
    %606 = vmatprep.subr.bf16.mxu0 0
    %607 = vmatpush2.bf16.msra.mxu0 0
    %608 = vmatprep.subr.bf16.mxu0 0
    %609 = vmatpush2.bf16.msra.mxu0 0
    %610 = vmatprep.subr.bf16.mxu0 0
    %611 = vmatpush2.bf16.msra.mxu0 0
    %612 = vmatprep.mubr.bf16.mxu0 0
    %613 = vmatmul.mubr.bf16.gmra.mxu0 %v578
    %v614 = vpop.f32.mrf.mxu0
    %v615 = vadd.f32 %v575, %v614
    %v616 = vpop.f32.mrf.mxu0
    %v617 = vadd.f32 %v576, %v616
    %v618 = vpop.f32.mrf.mxu0
    %v619 = vpop.f32.mrf.mxu0
    %620 = vdwg.mxu0
    %v621 = vtanh.pop %v615
    %v622 = vtanh.pop %v617
    %v623 = vmul.f32 %v621, 0.5
    %v624 = vadd.f32 %v623, 0.5
    %v625 = vmul.f32 %v624, %v536
    %627 = vrot.lane.b32.xlu0 %v621, 64
    %v628 = vpop.permute.xlu0 %627
    %v630 = vmul.f32 %v624, %v628
    %632 = vrot.lane.b32.xlu0 %v630, 32
    %v633 = vpop.permute.xlu0 %632
    %v635 = vadd.f32 %v625, %v633
    %v636 = vtanh.pop %v635
    %638 = vrot.lane.b32.xlu0 %v636, 64
    %v639 = vpop.permute.xlu0 %638
    %v641 = vmul.f32 %v624, %v639
    %v642 = vmul.f32 %v622, 0.5
    %v643 = vadd.f32 %v642, 0.5
    %v644 = vmul.f32 %v643, %v555
    %646 = vrot.lane.b32.xlu0 %v622, 64
    %v647 = vpop.permute.xlu0 %646
    %v649 = vmul.f32 %v643, %v647
    %651 = vrot.lane.b32.xlu0 %v649, 32
    %v652 = vpop.permute.xlu0 %651
    %v654 = vadd.f32 %v644, %v652
    %v655 = vtanh.pop %v654
    %657 = vrot.lane.b32.xlu0 %v655, 64
    %v658 = vpop.permute.xlu0 %657
    %v660 = vmul.f32 %v643, %v658
    %662 = vrot.lane.b32.xlu0 %v641, 32
    %v663 = vpop.permute.xlu0 %662
    %666 = vrot.lane.b32.xlu0 %v660, 64
    %v667 = vpop.permute.xlu0 %666
    %v669 = vsel %vm223, %v663, %v667
    %v670 = vpack.c.bf16 %v669, %v669
    %s671 = smul.u32 5, 2
    %s672 = smul.addr %s671, 8
    %s673 = scalar_lea.vmem [#allocation2], %s672
    %v674 = vld [vmem:[%s673] sm:$0xff]
    %v675 = vld [vmem:[%s673 + $0x8] sm:$0xff]
    %v677 = vsel %vm279, %v670, 0
    %679 = vmatprep.subr.bf16.mxu0 0
    %680 = vmatpush1.bf16.msra.mxu0 0
    %681 = vmatprep.subr.bf16.mxu0 0
    %682 = vmatpush1.bf16.msra.mxu0 0
    %683 = vmatprep.subr.bf16.mxu0 0
    %684 = vmatpush1.bf16.msra.mxu0 0
    %685 = vmatprep.subr.bf16.mxu0 0
    %686 = vmatpush1.bf16.msra.mxu0 0
    %687 = vmatprep.subr.bf16.mxu0 %v270
    %688 = vmatpush1.bf16.msra.mxu0 %v269
    %689 = vmatprep.subr.bf16.mxu0 %v268
    %690 = vmatpush1.bf16.msra.mxu0 %v267
    %691 = vmatprep.subr.bf16.mxu0 %v266
    %692 = vmatpush1.bf16.msra.mxu0 %v265
    %693 = vmatprep.subr.bf16.mxu0 %v264
    %694 = vmatpush1.bf16.msra.mxu0 %v263
    %695 = vmatprep.subr.bf16.mxu0 0
    %696 = vmatpush2.bf16.msra.mxu0 0
    %697 = vmatprep.subr.bf16.mxu0 0
    %698 = vmatpush2.bf16.msra.mxu0 0
    %699 = vmatprep.subr.bf16.mxu0 0
    %700 = vmatpush2.bf16.msra.mxu0 0
    %701 = vmatprep.subr.bf16.mxu0 0
    %702 = vmatpush2.bf16.msra.mxu0 0
    %703 = vmatprep.subr.bf16.mxu0 0
    %704 = vmatpush2.bf16.msra.mxu0 0
    %705 = vmatprep.subr.bf16.mxu0 0
    %706 = vmatpush2.bf16.msra.mxu0 0
    %707 = vmatprep.subr.bf16.mxu0 0
    %708 = vmatpush2.bf16.msra.mxu0 0
    %709 = vmatprep.subr.bf16.mxu0 0
    %710 = vmatpush2.bf16.msra.mxu0 0
    %711 = vmatprep.mubr.bf16.mxu0 0
    %712 = vmatmul.mubr.bf16.gmra.mxu0 %v677
    %v713 = vpop.f32.mrf.mxu0
    %v714 = vadd.f32 %v674, %v713
    %v715 = vpop.f32.mrf.mxu0
    %v716 = vadd.f32 %v675, %v715
    %v717 = vpop.f32.mrf.mxu0
    %v718 = vpop.f32.mrf.mxu0
    %719 = vdwg.mxu0
    %v720 = vtanh.pop %v714
    %v721 = vtanh.pop %v716
    %v722 = vmul.f32 %v720, 0.5
    %v723 = vadd.f32 %v722, 0.5
    %v724 = vmul.f32 %v723, %v635
    %726 = vrot.lane.b32.xlu0 %v720, 64
    %v727 = vpop.permute.xlu0 %726
    %v729 = vmul.f32 %v723, %v727
    %731 = vrot.lane.b32.xlu0 %v729, 32
    %v732 = vpop.permute.xlu0 %731
    %v734 = vadd.f32 %v724, %v732
    %v735 = vtanh.pop %v734
    %737 = vrot.lane.b32.xlu0 %v735, 64
    %v738 = vpop.permute.xlu0 %737
    %v740 = vmul.f32 %v723, %v738
    %v741 = vmul.f32 %v721, 0.5
    %v742 = vadd.f32 %v741, 0.5
    %v743 = vmul.f32 %v742, %v654
    %745 = vrot.lane.b32.xlu0 %v721, 64
    %v746 = vpop.permute.xlu0 %745
    %v748 = vmul.f32 %v742, %v746
    %750 = vrot.lane.b32.xlu0 %v748, 32
    %v751 = vpop.permute.xlu0 %750
    %v753 = vadd.f32 %v743, %v751
    %v754 = vtanh.pop %v753
    %756 = vrot.lane.b32.xlu0 %v754, 64
    %v757 = vpop.permute.xlu0 %756
    %v759 = vmul.f32 %v742, %v757
    %761 = vrot.lane.b32.xlu0 %v740, 32
    %v762 = vpop.permute.xlu0 %761
    %765 = vrot.lane.b32.xlu0 %v759, 64
    %v766 = vpop.permute.xlu0 %765
    %v768 = vsel %vm223, %v762, %v766
    %v769 = vpack.c.bf16 %v768, %v768
    %s770 = smul.u32 6, 2
    %s771 = smul.addr %s770, 8
    %s772 = scalar_lea.vmem [#allocation2], %s771
    %v773 = vld [vmem:[%s772] sm:$0xff]
    %v774 = vld [vmem:[%s772 + $0x8] sm:$0xff]
    %v776 = vsel %vm279, %v769, 0
    %778 = vmatprep.subr.bf16.mxu0 0
    %779 = vmatpush1.bf16.msra.mxu0 0
    %780 = vmatprep.subr.bf16.mxu0 0
    %781 = vmatpush1.bf16.msra.mxu0 0
    %782 = vmatprep.subr.bf16.mxu0 0
    %783 = vmatpush1.bf16.msra.mxu0 0
    %784 = vmatprep.subr.bf16.mxu0 0
    %785 = vmatpush1.bf16.msra.mxu0 0
    %786 = vmatprep.subr.bf16.mxu0 %v270
    %787 = vmatpush1.bf16.msra.mxu0 %v269
    %788 = vmatprep.subr.bf16.mxu0 %v268
    %789 = vmatpush1.bf16.msra.mxu0 %v267
    %790 = vmatprep.subr.bf16.mxu0 %v266
    %791 = vmatpush1.bf16.msra.mxu0 %v265
    %792 = vmatprep.subr.bf16.mxu0 %v264
    %793 = vmatpush1.bf16.msra.mxu0 %v263
    %794 = vmatprep.subr.bf16.mxu0 0
    %795 = vmatpush2.bf16.msra.mxu0 0
    %796 = vmatprep.subr.bf16.mxu0 0
    %797 = vmatpush2.bf16.msra.mxu0 0
    %798 = vmatprep.subr.bf16.mxu0 0
    %799 = vmatpush2.bf16.msra.mxu0 0
    %800 = vmatprep.subr.bf16.mxu0 0
    %801 = vmatpush2.bf16.msra.mxu0 0
    %802 = vmatprep.subr.bf16.mxu0 0
    %803 = vmatpush2.bf16.msra.mxu0 0
    %804 = vmatprep.subr.bf16.mxu0 0
    %805 = vmatpush2.bf16.msra.mxu0 0
    %806 = vmatprep.subr.bf16.mxu0 0
    %807 = vmatpush2.bf16.msra.mxu0 0
    %808 = vmatprep.subr.bf16.mxu0 0
    %809 = vmatpush2.bf16.msra.mxu0 0
    %810 = vmatprep.mubr.bf16.mxu0 0
    %811 = vmatmul.mubr.bf16.gmra.mxu0 %v776
    %v812 = vpop.f32.mrf.mxu0
    %v813 = vadd.f32 %v773, %v812
    %v814 = vpop.f32.mrf.mxu0
    %v815 = vadd.f32 %v774, %v814
    %v816 = vpop.f32.mrf.mxu0
    %v817 = vpop.f32.mrf.mxu0
    %818 = vdwg.mxu0
    %v819 = vtanh.pop %v813
    %v820 = vtanh.pop %v815
    %v821 = vmul.f32 %v819, 0.5
    %v822 = vadd.f32 %v821, 0.5
    %v823 = vmul.f32 %v822, %v734
    %825 = vrot.lane.b32.xlu0 %v819, 64
    %v826 = vpop.permute.xlu0 %825
    %v828 = vmul.f32 %v822, %v826
    %830 = vrot.lane.b32.xlu0 %v828, 32
    %v831 = vpop.permute.xlu0 %830
    %v833 = vadd.f32 %v823, %v831
    %v834 = vtanh.pop %v833
    %836 = vrot.lane.b32.xlu0 %v834, 64
    %v837 = vpop.permute.xlu0 %836
    %v839 = vmul.f32 %v822, %v837
    %v840 = vmul.f32 %v820, 0.5
    %v841 = vadd.f32 %v840, 0.5
    %v842 = vmul.f32 %v841, %v753
    %844 = vrot.lane.b32.xlu0 %v820, 64
    %v845 = vpop.permute.xlu0 %844
    %v847 = vmul.f32 %v841, %v845
    %849 = vrot.lane.b32.xlu0 %v847, 32
    %v850 = vpop.permute.xlu0 %849
    %v852 = vadd.f32 %v842, %v850
    %v853 = vtanh.pop %v852
    %855 = vrot.lane.b32.xlu0 %v853, 64
    %v856 = vpop.permute.xlu0 %855
    %v858 = vmul.f32 %v841, %v856
    %860 = vrot.lane.b32.xlu0 %v839, 32
    %v861 = vpop.permute.xlu0 %860
    %864 = vrot.lane.b32.xlu0 %v858, 64
    %v865 = vpop.permute.xlu0 %864
    %v867 = vsel %vm223, %v861, %v865
    %v868 = vpack.c.bf16 %v867, %v867
    %s869 = smul.u32 7, 2
    %s870 = smul.addr %s869, 8
    %s871 = scalar_lea.vmem [#allocation2], %s870
    %v872 = vld [vmem:[%s871] sm:$0xff]
    %v873 = vld [vmem:[%s871 + $0x8] sm:$0xff]
    %v875 = vsel %vm279, %v868, 0
    %877 = vmatprep.subr.bf16.mxu0 0
    %878 = vmatpush1.bf16.msra.mxu0 0
    %879 = vmatprep.subr.bf16.mxu0 0
    %880 = vmatpush1.bf16.msra.mxu0 0
    %881 = vmatprep.subr.bf16.mxu0 0
    %882 = vmatpush1.bf16.msra.mxu0 0
    %883 = vmatprep.subr.bf16.mxu0 0
    %884 = vmatpush1.bf16.msra.mxu0 0
    %885 = vmatprep.subr.bf16.mxu0 %v270
    %886 = vmatpush1.bf16.msra.mxu0 %v269
    %887 = vmatprep.subr.bf16.mxu0 %v268
    %888 = vmatpush1.bf16.msra.mxu0 %v267
    %889 = vmatprep.subr.bf16.mxu0 %v266
    %890 = vmatpush1.bf16.msra.mxu0 %v265
    %891 = vmatprep.subr.bf16.mxu0 %v264
    %892 = vmatpush1.bf16.msra.mxu0 %v263
    %893 = vmatprep.subr.bf16.mxu0 0
    %894 = vmatpush2.bf16.msra.mxu0 0
    %895 = vmatprep.subr.bf16.mxu0 0
    %896 = vmatpush2.bf16.msra.mxu0 0
    %897 = vmatprep.subr.bf16.mxu0 0
    %898 = vmatpush2.bf16.msra.mxu0 0
    %899 = vmatprep.subr.bf16.mxu0 0
    %900 = vmatpush2.bf16.msra.mxu0 0
    %901 = vmatprep.subr.bf16.mxu0 0
    %902 = vmatpush2.bf16.msra.mxu0 0
    %903 = vmatprep.subr.bf16.mxu0 0
    %904 = vmatpush2.bf16.msra.mxu0 0
    %905 = vmatprep.subr.bf16.mxu0 0
    %906 = vmatpush2.bf16.msra.mxu0 0
    %907 = vmatprep.subr.bf16.mxu0 0
    %908 = vmatpush2.bf16.msra.mxu0 0
    %909 = vmatprep.mubr.bf16.mxu0 0
    %910 = vmatmul.mubr.bf16.gmra.mxu0 %v875
    %v911 = vpop.f32.mrf.mxu0
    %v912 = vadd.f32 %v872, %v911
    %v913 = vpop.f32.mrf.mxu0
    %v914 = vadd.f32 %v873, %v913
    %v915 = vpop.f32.mrf.mxu0
    %v916 = vpop.f32.mrf.mxu0
    %917 = vdwg.mxu0
    %v918 = vtanh.pop %v912
    %v919 = vtanh.pop %v914
    %v920 = vmul.f32 %v918, 0.5
    %v921 = vadd.f32 %v920, 0.5
    %v922 = vmul.f32 %v921, %v833
    %924 = vrot.lane.b32.xlu0 %v918, 64
    %v925 = vpop.permute.xlu0 %924
    %v927 = vmul.f32 %v921, %v925
    %929 = vrot.lane.b32.xlu0 %v927, 32
    %v930 = vpop.permute.xlu0 %929
    %v932 = vadd.f32 %v922, %v930
    %v933 = vtanh.pop %v932
    %935 = vrot.lane.b32.xlu0 %v933, 64
    %v936 = vpop.permute.xlu0 %935
    %v938 = vmul.f32 %v921, %v936
    %v939 = vmul.f32 %v919, 0.5
    %v940 = vadd.f32 %v939, 0.5
    %v941 = vmul.f32 %v940, %v852
    %943 = vrot.lane.b32.xlu0 %v919, 64
    %v944 = vpop.permute.xlu0 %943
    %v946 = vmul.f32 %v940, %v944
    %948 = vrot.lane.b32.xlu0 %v946, 32
    %v949 = vpop.permute.xlu0 %948
    %v951 = vadd.f32 %v941, %v949
    %v952 = vtanh.pop %v951
    %954 = vrot.lane.b32.xlu0 %v952, 64
    %v955 = vpop.permute.xlu0 %954
    %v957 = vmul.f32 %v940, %v955
    %959 = vrot.lane.b32.xlu0 %v938, 32
    %v960 = vpop.permute.xlu0 %959
    %963 = vrot.lane.b32.xlu0 %v957, 64
    %v964 = vpop.permute.xlu0 %963
    %v966 = vsel %vm223, %v960, %v964
    %v967 = vpack.c.bf16 %v966, %v966
    %v968 = vld [vmem:[%s3 + $0x4] sm:$0xf]
    %v969 = vld [vmem:[%s3 + $0xc] sm:$0xf]
    %v970 = vld [vmem:[%s3 + $0x14] sm:$0xf]
    %v971 = vld [vmem:[%s3 + $0x1c] sm:$0xf]
    %v972 = vld [vmem:[%s3 + $0x24] sm:$0xf]
    %v973 = vld [vmem:[%s3 + $0x2c] sm:$0xf]
    %v974 = vld [vmem:[%s3 + $0x34] sm:$0xf]
    %v975 = vld [vmem:[%s3 + $0x3c] sm:$0xf]
    %v976 = vld [vmem:[#allocation3 + $0x1] sm:$0x1]
    %v978 = vlaneseq
    %v979 = vshrl.u32 %v978, 7
    %v980 = vsub.s32 0, %v979
    %v981 = vrot.slane %v976, %v980
    %v991 = vunpack.c.l.b16 %v968
    %v992 = vunpack.c.l.b16 %v969
    %v993 = vunpack.c.l.b16 %v970
    %v994 = vunpack.c.l.b16 %v971
    %v995 = vunpack.c.l.b16 %v972
    %v996 = vunpack.c.l.b16 %v973
    %v997 = vunpack.c.l.b16 %v974
    %v998 = vunpack.c.l.b16 %v975
    %v999 = vpack.c.b16 %v992, %v991
    %v1000 = vpack.c.b16 %v994, %v993
    %v1001 = vpack.c.b16 %v996, %v995
    %v1002 = vpack.c.b16 %v998, %v997
    %v1008 = vsel %vm279, %v967, 0
    %1010 = vmatprep.subr.bf16.mxu0 0
    %1011 = vmatpush1.bf16.msra.mxu0 0
    %1012 = vmatprep.subr.bf16.mxu0 0
    %1013 = vmatpush1.bf16.msra.mxu0 0
    %1014 = vmatprep.subr.bf16.mxu0 0
    %1015 = vmatpush1.bf16.msra.mxu0 0
    %1016 = vmatprep.subr.bf16.mxu0 0
    %1017 = vmatpush1.bf16.msra.mxu0 0
    %1018 = vmatprep.subr.bf16.mxu0 0
    %1019 = vmatpush1.bf16.msra.mxu0 %v1002
    %1020 = vmatprep.subr.bf16.mxu0 0
    %1021 = vmatpush1.bf16.msra.mxu0 %v1001
    %1022 = vmatprep.subr.bf16.mxu0 0
    %1023 = vmatpush1.bf16.msra.mxu0 %v1000
    %1024 = vmatprep.subr.bf16.mxu0 0
    %1025 = vmatpush1.bf16.msra.mxu0 %v999
    %1026 = vmatprep.subr.bf16.mxu0 0
    %1027 = vmatpush2.bf16.msra.mxu0 0
    %1028 = vmatprep.subr.bf16.mxu0 0
    %1029 = vmatpush2.bf16.msra.mxu0 0
    %1030 = vmatprep.subr.bf16.mxu0 0
    %1031 = vmatpush2.bf16.msra.mxu0 0
    %1032 = vmatprep.subr.bf16.mxu0 0
    %1033 = vmatpush2.bf16.msra.mxu0 0
    %1034 = vmatprep.subr.bf16.mxu0 0
    %1035 = vmatpush2.bf16.msra.mxu0 0
    %1036 = vmatprep.subr.bf16.mxu0 0
    %1037 = vmatpush2.bf16.msra.mxu0 0
    %1038 = vmatprep.subr.bf16.mxu0 0
    %1039 = vmatpush2.bf16.msra.mxu0 0
    %1040 = vmatprep.subr.bf16.mxu0 0
    %1041 = vmatpush2.bf16.msra.mxu0 0
    %1042 = vmatprep.mubr.bf16.mxu0 0
    %1043 = vmatmul.mubr.bf16.gmra.mxu0 %v1008
    %v1044 = vpop.f32.mrf.mxu0
    %v1045 = vadd.f32 %v981, %v1044
    %v1046 = vpop.f32.mrf.mxu0
    %v1047 = vpop.f32.mrf.mxu0
    %v1048 = vpop.f32.mrf.mxu0
    %1049 = vdwg.mxu0
    %v1050 = vtanh.pop %v1045
    %v1051 = vmul.f32 %v1050, 0.5
    %v1052 = vadd.f32 %v1051, 0.5
    %v1053 = vmul.f32 %v1052, %v951
    %1055 = vrot.lane.b32.xlu0 %v1050, 64
    %v1056 = vpop.permute.xlu0 %1055
    %v1058 = vmul.f32 %v1052, %v1056
    %1060 = vrot.lane.b32.xlu0 %v1058, 32
    %v1061 = vpop.permute.xlu0 %1060
    %v1063 = vadd.f32 %v1053, %v1061
    %v1064 = vtanh.pop %v1063
    %1066 = vrot.lane.b32.xlu0 %v1064, 64
    %v1067 = vpop.permute.xlu0 %1066
    %v1069 = vmul.f32 %v1052, %v1067
    %v1070 = vld [vmem:[%s4] sm:$0xff]
    %v1071 = vld [vmem:[%s4 + $0x8] sm:$0xff]
    %v1072 = vld [vmem:[%s4 + $0x10] sm:$0xff]
    %v1073 = vld [vmem:[%s4 + $0x18] sm:$0xff]
    %v1074 = vld [vmem:[%s5] sm:$0x1]
    %v1076 = vlaneseq
    %v1077 = vshrl.u32 %v1076, 7
    %v1078 = vsub.s32 0, %v1077
    %v1079 = vrot.slane %v1074, %v1078
    %1082 = vrot.lane.b32.xlu0 %v1069, 32
    %v1083 = vpop.permute.xlu0 %1082
    %v1084 = vsel %vm223, %v1083, 0
    %1086 = vmatprep.subr.mxu0 0.0
    %1087 = vmatpush1.msra.mxu0 0.0
    %1088 = vmatprep.subr.mxu0 0.0
    %1089 = vmatpush1.msra.mxu0 0.0
    %1090 = vmatprep.subr.mxu0 0.0
    %1091 = vmatpush1.msra.mxu0 0.0
    %1092 = vmatprep.subr.mxu0 0.0
    %1093 = vmatpush1.msra.mxu0 0.0
    %1094 = vmatprep.subr.mxu0 0.0
    %1095 = vmatpush1.msra.mxu0 0.0
    %1096 = vmatprep.subr.mxu0 0.0
    %1097 = vmatpush1.msra.mxu0 0.0
    %1098 = vmatprep.subr.mxu0 0.0
    %1099 = vmatpush1.msra.mxu0 0.0
    %1100 = vmatprep.subr.mxu0 0.0
    %1101 = vmatpush1.msra.mxu0 0.0
    %1102 = vmatprep.subr.mxu0 0.0
    %1103 = vmatpush1.msra.mxu0 0.0
    %1104 = vmatprep.subr.mxu0 0.0
    %1105 = vmatpush1.msra.mxu0 0.0
    %1106 = vmatprep.subr.mxu0 0.0
    %1107 = vmatpush1.msra.mxu0 0.0
    %1108 = vmatprep.subr.mxu0 0.0
    %1109 = vmatpush1.msra.mxu0 0.0
    %1110 = vmatprep.subr.mxu0 0.0
    %1111 = vmatpush1.msra.mxu0 %v1073
    %1112 = vmatprep.subr.mxu0 0.0
    %1113 = vmatpush1.msra.mxu0 %v1072
    %1114 = vmatprep.subr.mxu0 0.0
    %1115 = vmatpush1.msra.mxu0 %v1071
    %1116 = vmatprep.subr.mxu0 0.0
    %1117 = vmatpush1.msra.mxu0 %v1070
    %1118 = vmatprep.subr.mxu0 0.0
    %1119 = vmatpush2.msra.mxu0 0.0
    %1120 = vmatprep.subr.mxu0 0.0
    %1121 = vmatpush2.msra.mxu0 0.0
    %1122 = vmatprep.subr.mxu0 0.0
    %1123 = vmatpush2.msra.mxu0 0.0
    %1124 = vmatprep.subr.mxu0 0.0
    %1125 = vmatpush2.msra.mxu0 0.0
    %1126 = vmatprep.subr.mxu0 0.0
    %1127 = vmatpush2.msra.mxu0 0.0
    %1128 = vmatprep.subr.mxu0 0.0
    %1129 = vmatpush2.msra.mxu0 0.0
    %1130 = vmatprep.subr.mxu0 0.0
    %1131 = vmatpush2.msra.mxu0 0.0
    %1132 = vmatprep.subr.mxu0 0.0
    %1133 = vmatpush2.msra.mxu0 0.0
    %1134 = vmatprep.subr.mxu0 0.0
    %1135 = vmatpush2.msra.mxu0 0.0
    %1136 = vmatprep.subr.mxu0 0.0
    %1137 = vmatpush2.msra.mxu0 0.0
    %1138 = vmatprep.subr.mxu0 0.0
    %1139 = vmatpush2.msra.mxu0 0.0
    %1140 = vmatprep.subr.mxu0 0.0
    %1141 = vmatpush2.msra.mxu0 0.0
    %1142 = vmatprep.subr.mxu0 0.0
    %1143 = vmatpush2.msra.mxu0 0.0
    %1144 = vmatprep.subr.mxu0 0.0
    %1145 = vmatpush2.msra.mxu0 0.0
    %1146 = vmatprep.subr.mxu0 0.0
    %1147 = vmatpush2.msra.mxu0 0.0
    %1148 = vmatprep.subr.mxu0 0.0
    %1149 = vmatpush2.msra.mxu0 0.0
    %1150 = vmatprep.mubr.f32.mxu0 0.0
    %1151 = vmatmul.mubr.f32.gmra.mxu0 %v1084
    %v1152 = vpop.f32.mrf.mxu0
    %v1153 = vadd.f32 %v1079, %v1152
    %v1154 = vpop.f32.mrf.mxu0
    %1155 = vdwg.mxu0
    %vm1156 = vcmask 31744
    %v1157 = vsel %vm1156, %v1153, -inf
    %1158 = vmax.xlane.f32.xlu0 %v1157
    %v1159 = vpop.xlane.xlu0 %1158
    %v1160 = vsub.f32 %v1153, %v1159
    %v1161 = vmul.f32 %v1160, 1.442695
    %v1162 = vpow.pop %v1161
    %v1163 = vsel %vm1156, %v1162, 0.0
    %1164 = vadd.xlane.f32.xlu0 %v1163
    %v1165 = vpop.xlane.xlu0 %1164
    %v1166 = vrcp.pop %v1165
    %v1167 = vmul.f32 %v1162, %v1166
    %1168 = vst.msk [vmem:[%s6] sm:$0xff] %vm1156, %v1167
    // Predicated region
    $region30: #{tpu_custom_call.1} parent=1 // pred_check
      _
    $region31: #{tpu_custom_call.1} parent=1 // pred_check_branch
      %1170 = sbr.rel (0) target = $region33
    $region32: #{tpu_custom_call.1} parent=1 // pred_region
      _
    $region33: #{tpu_custom_call.1} parent=1 // pred_fallthru
      _
    // Predicated region
    $region34: #{tpu_custom_call.1} parent=1 // pred_check
      _
    $region35: #{tpu_custom_call.1} parent=1 // pred_check_branch
      %1172 = sbr.rel (0) target = $region37
    $region36: #{tpu_custom_call.1} parent=1 // pred_region
      _
    $region37: #{tpu_custom_call.1} parent=1 // pred_fallthru
      _
    %1173 = vsyncpa [#allocation4], 1

</llo_original>
